<compile_context>
chip_gen: v7x
topology: tpu7x:2x2x1
jax: 0.10.0
libtpu: 0.0.40
codegen_flags: <defaults>
</compile_context>

<pallas_src>
import functools

import jax
import jax.numpy as jnp
from jax.experimental import pallas as pl
from jax.experimental.pallas import tpu as pltpu


def _round_up(x: int, m: int) -> int:
    return ((x + m - 1) // m) * m


def mlp_kernel(x_ref, w1_ref, b1_ref, w2_ref, b2_ref, o_ref):
    # fc1: [TB, IN_P](bf16) @ [IN_P, H_P](bf16) -> f32 on the MXU.
    h = jnp.dot(x_ref[...], w1_ref[...], preferred_element_type=jnp.float32)
    # Bias + ReLU in f32 on the VPU (padded columns have zero bias -> stay 0,
    # and ReLU(0) = 0, so padding never contaminates fc2).
    h = jnp.maximum(h + b1_ref[...], 0.0)
    # fc2: [TB, H_P](bf16) @ [H_P, C_P](bf16) -> f32 on the MXU.
    out = jnp.dot(h.astype(jnp.bfloat16), w2_ref[...],
                  preferred_element_type=jnp.float32)
    o_ref[...] = (out + b2_ref[...]).astype(o_ref.dtype)


@functools.partial(jax.jit, static_argnames=("batch_tile",))
def neural_net_forward(x, w1, b1, w2, b2, *, batch_tile: int = 256):
    """x: [B, IN]; w1: [IN, H]; b1: [H]; w2: [H, C]; b2: [C] -> [B, C] (f32)."""
    B, IN = x.shape
    H = w1.shape[1]
    C = w2.shape[1]

    # Lane-dense padded dims (multiples of 128 on the lane axis).
    IN_P = _round_up(IN, 128)   # 784 -> 896
    H_P = _round_up(H, 128)     # 500 -> 512
    C_P = _round_up(C, 128)     # 10  -> 128

    # Batch tile: 256 saturates the v6e/v7x MXU; small batches just round up
    # to the sublane multiple (8) and run a single grid step.
    TB = batch_tile if B >= batch_tile else _round_up(B, 8)
    B_P = _round_up(B, TB)

    # Zero-pad; weights and matmul inputs in bf16, biases stay f32.
    x_p = jnp.zeros((B_P, IN_P), jnp.bfloat16).at[:B, :IN].set(
        x.astype(jnp.bfloat16))
    w1_p = jnp.zeros((IN_P, H_P), jnp.bfloat16).at[:IN, :H].set(
        w1.astype(jnp.bfloat16))
    b1_p = jnp.zeros((1, H_P), jnp.float32).at[:, :H].set(
        b1.astype(jnp.float32))
    w2_p = jnp.zeros((H_P, C_P), jnp.bfloat16).at[:H, :C].set(
        w2.astype(jnp.bfloat16))
    b2_p = jnp.zeros((1, C_P), jnp.float32).at[:, :C].set(
        b2.astype(jnp.float32))

    grid = (B_P // TB,)

    cost = pl.CostEstimate(
        flops=2 * B_P * (IN_P * H_P + H_P * C_P),
        transcendentals=0,
        bytes_accessed=(x_p.size * 2 + w1_p.size * 2 + w2_p.size * 2
                        + b1_p.size * 4 + b2_p.size * 4 + B_P * C_P * 4),
    )

    out_p = pl.pallas_call(
        mlp_kernel,
        out_shape=jax.ShapeDtypeStruct((B_P, C_P), jnp.float32),
        grid=grid,
        in_specs=[
            # Activations: blocked over batch (double-buffered by the pipeline).
            pl.BlockSpec((TB, IN_P), lambda i: (i, 0)),
            # Weights / biases: constant index_map -> VMEM-resident across steps.
            pl.BlockSpec((IN_P, H_P), lambda i: (0, 0)),
            pl.BlockSpec((1, H_P), lambda i: (0, 0)),
            pl.BlockSpec((H_P, C_P), lambda i: (0, 0)),
            pl.BlockSpec((1, C_P), lambda i: (0, 0)),
        ],
        out_specs=pl.BlockSpec((TB, C_P), lambda i: (i, 0)),
        compiler_params=pltpu.CompilerParams(
            dimension_semantics=("parallel",),
        ),
        cost_estimate=cost,
    )(x_p, w1_p, b1_p, w2_p, b2_p)

    # Slice away batch / class padding.
    return out_p[:B, :C]


if __name__ == "__main__":
    # Module defaults: input_size=784, hidden_size=500, num_classes=10.
    INPUT_SIZE, HIDDEN_SIZE, NUM_CLASSES = 784, 500, 10
    BATCH = 8

    key = jax.random.PRNGKey(0)
    kx, kw1, kb1, kw2, kb2 = jax.random.split(key, 5)

    x = jax.random.normal(kx, (BATCH, INPUT_SIZE), dtype=jnp.float32)

    # Deterministic parameter init (uniform, scaled like PyTorch Linear default).
    bound1 = 1.0 / (INPUT_SIZE ** 0.5)
    w1 = jax.random.uniform(kw1, (INPUT_SIZE, HIDDEN_SIZE),
                            minval=-bound1, maxval=bound1, dtype=jnp.float32)
    b1 = jax.random.uniform(kb1, (HIDDEN_SIZE,),
                            minval=-bound1, maxval=bound1, dtype=jnp.float32)

    bound2 = 1.0 / (HIDDEN_SIZE ** 0.5)
    w2 = jax.random.uniform(kw2, (HIDDEN_SIZE, NUM_CLASSES),
                            minval=-bound2, maxval=bound2, dtype=jnp.float32)
    b2 = jax.random.uniform(kb2, (NUM_CLASSES,),
                            minval=-bound2, maxval=bound2, dtype=jnp.float32)

    out = neural_net_forward(x, w1, b1, w2, b2)
    out = jax.block_until_ready(out)

    # Sanity check vs. plain-JAX f32 reference.  Tolerance accounts for the
    # bf16 storage of weights / activation inputs (f32 accumulation in-kernel).
    ref = jnp.maximum(x @ w1 + b1, 0.0) @ w2 + b2
    assert out.shape == (BATCH, NUM_CLASSES)
    assert jnp.allclose(out, ref, atol=3e-2, rtol=3e-2), (
        float(jnp.max(jnp.abs(out - ref))))

    print("KERNEL_OK")
</pallas_src>

<mosaic_0001>
module attributes {stable_mosaic.version = 11 : i64} {
  func.func @mlp_kernel(%arg0: i32, %arg1: memref<8x896xbf16, #tpu.memory_space<vmem>>, %arg2: memref<896x512xbf16, #tpu.memory_space<vmem>>, %arg3: memref<1x512xf32, #tpu.memory_space<vmem>>, %arg4: memref<512x128xbf16, #tpu.memory_space<vmem>>, %arg5: memref<1x128xf32, #tpu.memory_space<vmem>>, %arg6: memref<8x128xf32, #tpu.memory_space<vmem>>) attributes {dimension_semantics = [#tpu.dimension_semantics<parallel>], iteration_bounds = array<i64: 1>, scalar_prefetch = 0 : i64, scratch_operands = 0 : i64, tpu.core_type = #tpu.core_type<tc>, window_params = [{transform_indices = @transform_0, window_bounds = array<i64: 8, 896>}, {pipeline_mode = #tpu.pipeline_mode<synchronous>, transform_indices = @transform_1, window_bounds = array<i64: 896, 512>}, {pipeline_mode = #tpu.pipeline_mode<synchronous>, transform_indices = @transform_2, window_bounds = array<i64: 1, 512>}, {pipeline_mode = #tpu.pipeline_mode<synchronous>, transform_indices = @transform_3, window_bounds = array<i64: 512, 128>}, {pipeline_mode = #tpu.pipeline_mode<synchronous>, transform_indices = @transform_4, window_bounds = array<i64: 1, 128>}, {transform_indices = @transform_5, window_bounds = array<i64: 8, 128>}]} {
    %c0 = arith.constant 0 : index
    %c0_0 = arith.constant 0 : index
    %0 = vector.load %arg1[%c0, %c0_0] : memref<8x896xbf16, #tpu.memory_space<vmem>>, vector<8x896xbf16>
    %c0_1 = arith.constant 0 : index
    %c0_2 = arith.constant 0 : index
    %1 = vector.load %arg2[%c0_1, %c0_2] : memref<896x512xbf16, #tpu.memory_space<vmem>>, vector<896x512xbf16>
    %cst = arith.constant dense<0.000000e+00> : vector<8x512xf32>
    %2 = tpu.matmul %0, %1, %cst {dimension_numbers = #tpu.dot_dimension_numbers<[1], [0], [0], [1], [0, 0, 1, 1], [], []>} : vector<8x896xbf16>, vector<896x512xbf16>, vector<8x512xf32> -> vector<8x512xf32>
    %c0_3 = arith.constant 0 : index
    %c0_4 = arith.constant 0 : index
    %3 = vector.load %arg3[%c0_3, %c0_4] : memref<1x512xf32, #tpu.memory_space<vmem>>, vector<1x512xf32>
    %4 = vector.broadcast %3 : vector<1x512xf32> to vector<8x512xf32>
    %5 = arith.addf %2, %4 : vector<8x512xf32>
    %cst_5 = arith.constant 0.000000e+00 : f32
    %6 = vector.broadcast %cst_5 : f32 to vector<8x512xf32>
    %7 = arith.maximumf %5, %6 : vector<8x512xf32>
    %8 = arith.truncf %7 : vector<8x512xf32> to vector<8x512xbf16>
    %c0_6 = arith.constant 0 : index
    %c0_7 = arith.constant 0 : index
    %9 = vector.load %arg4[%c0_6, %c0_7] : memref<512x128xbf16, #tpu.memory_space<vmem>>, vector<512x128xbf16>
    %cst_8 = arith.constant dense<0.000000e+00> : vector<8x128xf32>
    %10 = tpu.matmul %8, %9, %cst_8 {dimension_numbers = #tpu.dot_dimension_numbers<[1], [0], [0], [1], [0, 0, 1, 1], [], []>} : vector<8x512xbf16>, vector<512x128xbf16>, vector<8x128xf32> -> vector<8x128xf32>
    %c0_9 = arith.constant 0 : index
    %c0_10 = arith.constant 0 : index
    %11 = vector.load %arg5[%c0_9, %c0_10] : memref<1x128xf32, #tpu.memory_space<vmem>>, vector<1x128xf32>
    %12 = vector.broadcast %11 : vector<1x128xf32> to vector<8x128xf32>
    %13 = arith.addf %10, %12 : vector<8x128xf32>
    %c0_11 = arith.constant 0 : index
    %c0_12 = arith.constant 0 : index
    %14 = vector.load %arg6[%c0_11, %c0_12] : memref<8x128xf32, #tpu.memory_space<vmem>>, vector<8x128xf32>
    tpu.vector_store %arg6[%c0_11, %c0_12], %13 {strides = array<i32>} : memref<8x128xf32, #tpu.memory_space<vmem>>, vector<8x128xf32>,
    return
  }
  func.func @transform_0(%arg0: i32) -> (i32, i32) {
    %c0_i32 = arith.constant 0 : i32
    %c0_i32_0 = arith.constant 0 : i32
    return %arg0, %c0_i32 : i32, i32
  }
  func.func @transform_1(%arg0: i32) -> (i32, i32) {
    %c0_i32 = arith.constant 0 : i32
    %c0_i32_0 = arith.constant 0 : i32
    %c0_i32_1 = arith.constant 0 : i32
    return %c0_i32, %c0_i32_0 : i32, i32
  }
  func.func @transform_2(%arg0: i32) -> (i32, i32) {
    %c0_i32 = arith.constant 0 : i32
    %c0_i32_0 = arith.constant 0 : i32
    %c0_i32_1 = arith.constant 0 : i32
    return %c0_i32, %c0_i32_0 : i32, i32
  }
  func.func @transform_3(%arg0: i32) -> (i32, i32) {
    %c0_i32 = arith.constant 0 : i32
    %c0_i32_0 = arith.constant 0 : i32
    %c0_i32_1 = arith.constant 0 : i32
    return %c0_i32, %c0_i32_0 : i32, i32
  }
  func.func @transform_4(%arg0: i32) -> (i32, i32) {
    %c0_i32 = arith.constant 0 : i32
    %c0_i32_0 = arith.constant 0 : i32
    %c0_i32_1 = arith.constant 0 : i32
    return %c0_i32, %c0_i32_0 : i32, i32
  }
  func.func @transform_5(%arg0: i32) -> (i32, i32) {
    %c0_i32 = arith.constant 0 : i32
    %c0_i32_0 = arith.constant 0 : i32
    return %arg0, %c0_i32 : i32, i32
  }
}

</mosaic_0001>

<llo_original>
// kernel: neural_net_forward.1
$region0: #{neural_net_forward.1}
  #allocation0 [shape = 'u32[]', space=smem, size = 0x4, offset = 0x4, fixed_abs, tag = 'smem constant byte address 0x4 - core index']
  #allocation1 [shape = 'u32[144,128]{1,0:T(1,128)}', space=vmem, size = 0x12000, scoped, tag = 'internal scratch']
  %s0 = inlined_call_operand.vmem [shape: bf16[8,896], index: 0, kind: input, shape index: {}]
  %s1 = inlined_call_operand.vmem [shape: bf16[896,512], index: 1, kind: input, shape index: {}]
  %s2 = inlined_call_operand.vmem [shape: f32[1,512], index: 2, kind: input, shape index: {}]
  %s3 = inlined_call_operand.vmem [shape: bf16[512,128], index: 3, kind: input, shape index: {}]
  %s4 = inlined_call_operand.vmem [shape: f32[1,128], index: 4, kind: input, shape index: {}]
  %s5 = inlined_call_operand.hbm [shape: f32[8,128], index: 5, kind: output, shape index: {}]
  %s6 = sld [smem:[#allocation0]]
  $region30: #{neural_net_forward.1} parent=0
    _
  %s8 = ssub.s32 1, %s6
  %s9 = scalar_select 0, %s8, %s6
  $region1: #{neural_net_forward.1} parent=0
    #allocation2 [shape = 'u8[4096]{0}', space=vmem, size = 0x1000, scoped, tag = 'output window, operand 0, single buffered']
    #allocation3 [shape = 's32[1]{0}', space=sflag, size = 0x4, scoped, tag = 'scoped memory for neural_net_forward.1']
    %10 = vsyncpa [#allocation3], 0
    // Predicated region
    $region2: #{neural_net_forward.1} parent=1 // pred_check
      _
    $region3: #{neural_net_forward.1} parent=1 // pred_check_branch
      %12 = sbr.rel (0) target = $region5
    $region4: #{neural_net_forward.1} parent=1 // pred_region
      _
    $region5: #{neural_net_forward.1} parent=1 // pred_fallthru
      _
    // Predicated region
    $region6: #{neural_net_forward.1} parent=1 // pred_check
      _
    $region7: #{neural_net_forward.1} parent=1 // pred_check_branch
      %14 = sbr.rel (0) target = $region9
    $region8: #{neural_net_forward.1} parent=1 // pred_region
      _
    $region9: #{neural_net_forward.1} parent=1 // pred_fallthru
      _
    // Predicated region
    $region10: #{neural_net_forward.1} parent=1 // pred_check
      _
    $region11: #{neural_net_forward.1} parent=1 // pred_check_branch
      %16 = sbr.rel (0) target = $region13
    $region12: #{neural_net_forward.1} parent=1 // pred_region
      _
    $region13: #{neural_net_forward.1} parent=1 // pred_fallthru
      _
    // Predicated region
    $region14: #{neural_net_forward.1} parent=1 // pred_check
      _
    $region15: #{neural_net_forward.1} parent=1 // pred_check_branch
      %18 = sbr.rel (0) target = $region17
    $region16: #{neural_net_forward.1} parent=1 // pred_region
      _
    $region17: #{neural_net_forward.1} parent=1 // pred_fallthru
      _
    // Predicated region
    $region18: #{neural_net_forward.1} parent=1 // pred_check
      _
    $region19: #{neural_net_forward.1} parent=1 // pred_check_branch
      %20 = sbr.rel (0) target = $region21
    $region20: #{neural_net_forward.1} parent=1 // pred_region
      _
    $region21: #{neural_net_forward.1} parent=1 // pred_fallthru
      _
    %v22 = vld [vmem:[%s0] sm:$0xff]
    %v23 = vld [vmem:[%s0 + $0x8] sm:$0xff]
    %v24 = vld [vmem:[%s0 + $0x10] sm:$0xff]
    %v25 = vld [vmem:[%s0 + $0x18] sm:$0xf]
    %v26 = vld [vmem:[%s1] sm:$0xff]
    %v27 = vld [vmem:[%s1 + $0x8] sm:$0xff]
    %v28 = vld [vmem:[%s1 + $0x10] sm:$0xff]
    %v29 = vld [vmem:[%s1 + $0x18] sm:$0xff]
    %v30 = vld [vmem:[%s1 + $0x20] sm:$0xff]
    %v31 = vld [vmem:[%s1 + $0x28] sm:$0xff]
    %v32 = vld [vmem:[%s1 + $0x30] sm:$0xff]
    %v33 = vld [vmem:[%s1 + $0x38] sm:$0xff]
    %v34 = vld [vmem:[%s1 + $0x40] sm:$0xff]
    %v35 = vld [vmem:[%s1 + $0x48] sm:$0xff]
    %v36 = vld [vmem:[%s1 + $0x50] sm:$0xff]
    %v37 = vld [vmem:[%s1 + $0x58] sm:$0xff]
    %v38 = vld [vmem:[%s1 + $0x60] sm:$0xff]
    %v39 = vld [vmem:[%s1 + $0x68] sm:$0xff]
    %v40 = vld [vmem:[%s1 + $0x70] sm:$0xff]
    %v41 = vld [vmem:[%s1 + $0x78] sm:$0xff]
    %v42 = vld [vmem:[%s1 + $0x80] sm:$0xff]
    %v43 = vld [vmem:[%s1 + $0x88] sm:$0xff]
    %v44 = vld [vmem:[%s1 + $0x90] sm:$0xff]
    %v45 = vld [vmem:[%s1 + $0x98] sm:$0xff]
    %v46 = vld [vmem:[%s1 + $0xa0] sm:$0xff]
    %v47 = vld [vmem:[%s1 + $0xa8] sm:$0xff]
    %v48 = vld [vmem:[%s1 + $0xb0] sm:$0xff]
    %v49 = vld [vmem:[%s1 + $0xb8] sm:$0xff]
    %v50 = vld [vmem:[%s1 + $0xc0] sm:$0xff]
    %v51 = vld [vmem:[%s1 + $0xc8] sm:$0xff]
    %v52 = vld [vmem:[%s1 + $0xd0] sm:$0xff]
    %v53 = vld [vmem:[%s1 + $0xd8] sm:$0xff]
    %v54 = vld [vmem:[%s1 + $0xe0] sm:$0xff]
    %v55 = vld [vmem:[%s1 + $0xe8] sm:$0xff]
    %v56 = vld [vmem:[%s1 + $0xf0] sm:$0xff]
    %v57 = vld [vmem:[%s1 + $0xf8] sm:$0xff]
    %v58 = vld [vmem:[%s1 + $0x100] sm:$0xff]
    %v59 = vld [vmem:[%s1 + $0x108] sm:$0xff]
    %v60 = vld [vmem:[%s1 + $0x110] sm:$0xff]
    %v61 = vld [vmem:[%s1 + $0x118] sm:$0xff]
    %v62 = vld [vmem:[%s1 + $0x120] sm:$0xff]
    %v63 = vld [vmem:[%s1 + $0x128] sm:$0xff]
    %v64 = vld [vmem:[%s1 + $0x130] sm:$0xff]
    %v65 = vld [vmem:[%s1 + $0x138] sm:$0xff]
    %v66 = vld [vmem:[%s1 + $0x140] sm:$0xff]
    %v67 = vld [vmem:[%s1 + $0x148] sm:$0xff]
    %v68 = vld [vmem:[%s1 + $0x150] sm:$0xff]
    %v69 = vld [vmem:[%s1 + $0x158] sm:$0xff]
    %v70 = vld [vmem:[%s1 + $0x160] sm:$0xff]
    %v71 = vld [vmem:[%s1 + $0x168] sm:$0xff]
    %v72 = vld [vmem:[%s1 + $0x170] sm:$0xff]
    %v73 = vld [vmem:[%s1 + $0x178] sm:$0xff]
    %v74 = vld [vmem:[%s1 + $0x180] sm:$0xff]
    %v75 = vld [vmem:[%s1 + $0x188] sm:$0xff]
    %v76 = vld [vmem:[%s1 + $0x190] sm:$0xff]
    %v77 = vld [vmem:[%s1 + $0x198] sm:$0xff]
    %v78 = vld [vmem:[%s1 + $0x1a0] sm:$0xff]
    %v79 = vld [vmem:[%s1 + $0x1a8] sm:$0xff]
    %v80 = vld [vmem:[%s1 + $0x1b0] sm:$0xff]
    %v81 = vld [vmem:[%s1 + $0x1b8] sm:$0xff]
    %v82 = vld [vmem:[%s1 + $0x1c0] sm:$0xff]
    %v83 = vld [vmem:[%s1 + $0x1c8] sm:$0xff]
    %v84 = vld [vmem:[%s1 + $0x1d0] sm:$0xff]
    %v85 = vld [vmem:[%s1 + $0x1d8] sm:$0xff]
    %v86 = vld [vmem:[%s1 + $0x1e0] sm:$0xff]
    %v87 = vld [vmem:[%s1 + $0x1e8] sm:$0xff]
    %v88 = vld [vmem:[%s1 + $0x1f0] sm:$0xff]
    %v89 = vld [vmem:[%s1 + $0x1f8] sm:$0xff]
    %v90 = vld [vmem:[%s1 + $0x200] sm:$0xff]
    %v91 = vld [vmem:[%s1 + $0x208] sm:$0xff]
    %v92 = vld [vmem:[%s1 + $0x210] sm:$0xff]
    %v93 = vld [vmem:[%s1 + $0x218] sm:$0xff]
    %v94 = vld [vmem:[%s1 + $0x220] sm:$0xff]
    %v95 = vld [vmem:[%s1 + $0x228] sm:$0xff]
    %v96 = vld [vmem:[%s1 + $0x230] sm:$0xff]
    %v97 = vld [vmem:[%s1 + $0x238] sm:$0xff]
    %v98 = vld [vmem:[%s1 + $0x240] sm:$0xff]
    %v99 = vld [vmem:[%s1 + $0x248] sm:$0xff]
    %v100 = vld [vmem:[%s1 + $0x250] sm:$0xff]
    %v101 = vld [vmem:[%s1 + $0x258] sm:$0xff]
    %v102 = vld [vmem:[%s1 + $0x260] sm:$0xff]
    %v103 = vld [vmem:[%s1 + $0x268] sm:$0xff]
    %v104 = vld [vmem:[%s1 + $0x270] sm:$0xff]
    %v105 = vld [vmem:[%s1 + $0x278] sm:$0xff]
    %v106 = vld [vmem:[%s1 + $0x280] sm:$0xff]
    %v107 = vld [vmem:[%s1 + $0x288] sm:$0xff]
    %v108 = vld [vmem:[%s1 + $0x290] sm:$0xff]
    %v109 = vld [vmem:[%s1 + $0x298] sm:$0xff]
    %v110 = vld [vmem:[%s1 + $0x2a0] sm:$0xff]
    %v111 = vld [vmem:[%s1 + $0x2a8] sm:$0xff]
    %v112 = vld [vmem:[%s1 + $0x2b0] sm:$0xff]
    %v113 = vld [vmem:[%s1 + $0x2b8] sm:$0xff]
    %v114 = vld [vmem:[%s1 + $0x2c0] sm:$0xff]
    %v115 = vld [vmem:[%s1 + $0x2c8] sm:$0xff]
    %v116 = vld [vmem:[%s1 + $0x2d0] sm:$0xff]
    %v117 = vld [vmem:[%s1 + $0x2d8] sm:$0xff]
    %v118 = vld [vmem:[%s1 + $0x2e0] sm:$0xff]
    %v119 = vld [vmem:[%s1 + $0x2e8] sm:$0xff]
    %v120 = vld [vmem:[%s1 + $0x2f0] sm:$0xff]
    %v121 = vld [vmem:[%s1 + $0x2f8] sm:$0xff]
    %v122 = vld [vmem:[%s1 + $0x300] sm:$0xff]
    %v123 = vld [vmem:[%s1 + $0x308] sm:$0xff]
    %v124 = vld [vmem:[%s1 + $0x310] sm:$0xff]
    %v125 = vld [vmem:[%s1 + $0x318] sm:$0xff]
    %v126 = vld [vmem:[%s1 + $0x320] sm:$0xff]
    %v127 = vld [vmem:[%s1 + $0x328] sm:$0xff]
    %v128 = vld [vmem:[%s1 + $0x330] sm:$0xff]
    %v129 = vld [vmem:[%s1 + $0x338] sm:$0xff]
    %v130 = vld [vmem:[%s1 + $0x340] sm:$0xff]
    %v131 = vld [vmem:[%s1 + $0x348] sm:$0xff]
    %v132 = vld [vmem:[%s1 + $0x350] sm:$0xff]
    %v133 = vld [vmem:[%s1 + $0x358] sm:$0xff]
    %v134 = vld [vmem:[%s1 + $0x360] sm:$0xff]
    %v135 = vld [vmem:[%s1 + $0x368] sm:$0xff]
    %v136 = vld [vmem:[%s1 + $0x370] sm:$0xff]
    %v137 = vld [vmem:[%s1 + $0x378] sm:$0xff]
    %v138 = vld [vmem:[%s1 + $0x380] sm:$0xff]
    %v139 = vld [vmem:[%s1 + $0x388] sm:$0xff]
    %v140 = vld [vmem:[%s1 + $0x390] sm:$0xff]
    %v141 = vld [vmem:[%s1 + $0x398] sm:$0xff]
    %v142 = vld [vmem:[%s1 + $0x3a0] sm:$0xff]
    %v143 = vld [vmem:[%s1 + $0x3a8] sm:$0xff]
    %v144 = vld [vmem:[%s1 + $0x3b0] sm:$0xff]
    %v145 = vld [vmem:[%s1 + $0x3b8] sm:$0xff]
    %v146 = vld [vmem:[%s1 + $0x3c0] sm:$0xff]
    %v147 = vld [vmem:[%s1 + $0x3c8] sm:$0xff]
    %v148 = vld [vmem:[%s1 + $0x3d0] sm:$0xff]
    %v149 = vld [vmem:[%s1 + $0x3d8] sm:$0xff]
    %v150 = vld [vmem:[%s1 + $0x3e0] sm:$0xff]
    %v151 = vld [vmem:[%s1 + $0x3e8] sm:$0xff]
    %v152 = vld [vmem:[%s1 + $0x3f0] sm:$0xff]
    %v153 = vld [vmem:[%s1 + $0x3f8] sm:$0xff]
    %v154 = vld [vmem:[%s1 + $0x400] sm:$0xff]
    %v155 = vld [vmem:[%s1 + $0x408] sm:$0xff]
    %v156 = vld [vmem:[%s1 + $0x410] sm:$0xff]
    %v157 = vld [vmem:[%s1 + $0x418] sm:$0xff]
    %v158 = vld [vmem:[%s1 + $0x420] sm:$0xff]
    %v159 = vld [vmem:[%s1 + $0x428] sm:$0xff]
    %v160 = vld [vmem:[%s1 + $0x430] sm:$0xff]
    %v161 = vld [vmem:[%s1 + $0x438] sm:$0xff]
    %v162 = vld [vmem:[%s1 + $0x440] sm:$0xff]
    %v163 = vld [vmem:[%s1 + $0x448] sm:$0xff]
    %v164 = vld [vmem:[%s1 + $0x450] sm:$0xff]
    %v165 = vld [vmem:[%s1 + $0x458] sm:$0xff]
    %v166 = vld [vmem:[%s1 + $0x460] sm:$0xff]
    %v167 = vld [vmem:[%s1 + $0x468] sm:$0xff]
    %v168 = vld [vmem:[%s1 + $0x470] sm:$0xff]
    %v169 = vld [vmem:[%s1 + $0x478] sm:$0xff]
    %v170 = vld [vmem:[%s1 + $0x480] sm:$0xff]
    %v171 = vld [vmem:[%s1 + $0x488] sm:$0xff]
    %v172 = vld [vmem:[%s1 + $0x490] sm:$0xff]
    %v173 = vld [vmem:[%s1 + $0x498] sm:$0xff]
    %v174 = vld [vmem:[%s1 + $0x4a0] sm:$0xff]
    %v175 = vld [vmem:[%s1 + $0x4a8] sm:$0xff]
    %v176 = vld [vmem:[%s1 + $0x4b0] sm:$0xff]
    %v177 = vld [vmem:[%s1 + $0x4b8] sm:$0xff]
    %v178 = vld [vmem:[%s1 + $0x4c0] sm:$0xff]
    %v179 = vld [vmem:[%s1 + $0x4c8] sm:$0xff]
    %v180 = vld [vmem:[%s1 + $0x4d0] sm:$0xff]
    %v181 = vld [vmem:[%s1 + $0x4d8] sm:$0xff]
    %v182 = vld [vmem:[%s1 + $0x4e0] sm:$0xff]
    %v183 = vld [vmem:[%s1 + $0x4e8] sm:$0xff]
    %v184 = vld [vmem:[%s1 + $0x4f0] sm:$0xff]
    %v185 = vld [vmem:[%s1 + $0x4f8] sm:$0xff]
    %v186 = vld [vmem:[%s1 + $0x500] sm:$0xff]
    %v187 = vld [vmem:[%s1 + $0x508] sm:$0xff]
    %v188 = vld [vmem:[%s1 + $0x510] sm:$0xff]
    %v189 = vld [vmem:[%s1 + $0x518] sm:$0xff]
    %v190 = vld [vmem:[%s1 + $0x520] sm:$0xff]
    %v191 = vld [vmem:[%s1 + $0x528] sm:$0xff]
    %v192 = vld [vmem:[%s1 + $0x530] sm:$0xff]
    %v193 = vld [vmem:[%s1 + $0x538] sm:$0xff]
    %v194 = vld [vmem:[%s1 + $0x540] sm:$0xff]
    %v195 = vld [vmem:[%s1 + $0x548] sm:$0xff]
    %v196 = vld [vmem:[%s1 + $0x550] sm:$0xff]
    %v197 = vld [vmem:[%s1 + $0x558] sm:$0xff]
    %v198 = vld [vmem:[%s1 + $0x560] sm:$0xff]
    %v199 = vld [vmem:[%s1 + $0x568] sm:$0xff]
    %v200 = vld [vmem:[%s1 + $0x570] sm:$0xff]
    %v201 = vld [vmem:[%s1 + $0x578] sm:$0xff]
    %v202 = vld [vmem:[%s1 + $0x580] sm:$0xff]
    %v203 = vld [vmem:[%s1 + $0x588] sm:$0xff]
    %v204 = vld [vmem:[%s1 + $0x590] sm:$0xff]
    %v205 = vld [vmem:[%s1 + $0x598] sm:$0xff]
    %v206 = vld [vmem:[%s1 + $0x5a0] sm:$0xff]
    %v207 = vld [vmem:[%s1 + $0x5a8] sm:$0xff]
    %v208 = vld [vmem:[%s1 + $0x5b0] sm:$0xff]
    %v209 = vld [vmem:[%s1 + $0x5b8] sm:$0xff]
    %v210 = vld [vmem:[%s1 + $0x5c0] sm:$0xff]
    %v211 = vld [vmem:[%s1 + $0x5c8] sm:$0xff]
    %v212 = vld [vmem:[%s1 + $0x5d0] sm:$0xff]
    %v213 = vld [vmem:[%s1 + $0x5d8] sm:$0xff]
    %v214 = vld [vmem:[%s1 + $0x5e0] sm:$0xff]
    %v215 = vld [vmem:[%s1 + $0x5e8] sm:$0xff]
    %v216 = vld [vmem:[%s1 + $0x5f0] sm:$0xff]
    %v217 = vld [vmem:[%s1 + $0x5f8] sm:$0xff]
    %v218 = vld [vmem:[%s1 + $0x600] sm:$0xff]
    %v219 = vld [vmem:[%s1 + $0x608] sm:$0xff]
    %v220 = vld [vmem:[%s1 + $0x610] sm:$0xff]
    %v221 = vld [vmem:[%s1 + $0x618] sm:$0xff]
    %v222 = vld [vmem:[%s1 + $0x620] sm:$0xff]
    %v223 = vld [vmem:[%s1 + $0x628] sm:$0xff]
    %v224 = vld [vmem:[%s1 + $0x630] sm:$0xff]
    %v225 = vld [vmem:[%s1 + $0x638] sm:$0xff]
    %v226 = vld [vmem:[%s1 + $0x640] sm:$0xff]
    %v227 = vld [vmem:[%s1 + $0x648] sm:$0xff]
    %v228 = vld [vmem:[%s1 + $0x650] sm:$0xff]
    %v229 = vld [vmem:[%s1 + $0x658] sm:$0xff]
    %v230 = vld [vmem:[%s1 + $0x660] sm:$0xff]
    %v231 = vld [vmem:[%s1 + $0x668] sm:$0xff]
    %v232 = vld [vmem:[%s1 + $0x670] sm:$0xff]
    %v233 = vld [vmem:[%s1 + $0x678] sm:$0xff]
    %v234 = vld [vmem:[%s1 + $0x680] sm:$0xff]
    %v235 = vld [vmem:[%s1 + $0x688] sm:$0xff]
    %v236 = vld [vmem:[%s1 + $0x690] sm:$0xff]
    %v237 = vld [vmem:[%s1 + $0x698] sm:$0xff]
    %v238 = vld [vmem:[%s1 + $0x6a0] sm:$0xff]
    %v239 = vld [vmem:[%s1 + $0x6a8] sm:$0xff]
    %v240 = vld [vmem:[%s1 + $0x6b0] sm:$0xff]
    %v241 = vld [vmem:[%s1 + $0x6b8] sm:$0xff]
    %v242 = vld [vmem:[%s1 + $0x6c0] sm:$0xff]
    %v243 = vld [vmem:[%s1 + $0x6c8] sm:$0xff]
    %v244 = vld [vmem:[%s1 + $0x6d0] sm:$0xff]
    %v245 = vld [vmem:[%s1 + $0x6d8] sm:$0xff]
    %v246 = vld [vmem:[%s1 + $0x6e0] sm:$0xff]
    %v247 = vld [vmem:[%s1 + $0x6e8] sm:$0xff]
    %v248 = vld [vmem:[%s1 + $0x6f0] sm:$0xff]
    %v249 = vld [vmem:[%s1 + $0x6f8] sm:$0xff]
    %v250 = vld [vmem:[%s2] sm:$0xf]
    %v252 = vlaneseq
    %v253 = vshrl.u32 %v252, 7
    %v254 = vsub.s32 0, %v253
    %v255 = vrot.slane %v250, %v254
    %v256 = vlaneseq
    %v257 = vshrl.u32 %v256, 7
    %v258 = vsub.s32 1, %v257
    %v259 = vrot.slane %v250, %v258
    %v260 = vlaneseq
    %v261 = vshrl.u32 %v260, 7
    %v262 = vsub.s32 2, %v261
    %v263 = vrot.slane %v250, %v262
    %v264 = vlaneseq
    %v265 = vshrl.u32 %v264, 7
    %v266 = vsub.s32 3, %v265
    %v267 = vrot.slane %v250, %v266
    %v276 = vunpack.c.l.b16 %v22
    %v277 = vunpack.c.h.b16 %v22
    %v278 = vunpack.c.l.b16 %v23
    %v279 = vunpack.c.h.b16 %v23
    %v280 = vunpack.c.l.b16 %v24
    %v281 = vunpack.c.h.b16 %v24
    %v282 = vunpack.c.l.b16 %v25
    %v283 = vpack.c.b16 %v276, %v276
    %v284 = vpack.c.b16 %v277, %v277
    %v285 = vpack.c.b16 %v278, %v278
    %v286 = vpack.c.b16 %v279, %v279
    %v287 = vpack.c.b16 %v280, %v280
    %v288 = vpack.c.b16 %v281, %v281
    %v289 = vpack.c.b16 %v282, %v282
    %v521 = vunpack.c.l.b16 %v26
    %v522 = vunpack.c.h.b16 %v26
    %v523 = vunpack.c.l.b16 %v27
    %v524 = vunpack.c.h.b16 %v27
    %v525 = vunpack.c.l.b16 %v28
    %v526 = vunpack.c.h.b16 %v28
    %v527 = vunpack.c.l.b16 %v29
    %v528 = vunpack.c.h.b16 %v29
    %v529 = vunpack.c.l.b16 %v30
    %v530 = vunpack.c.h.b16 %v30
    %v531 = vunpack.c.l.b16 %v31
    %v532 = vunpack.c.h.b16 %v31
    %v533 = vunpack.c.l.b16 %v32
    %v534 = vunpack.c.h.b16 %v32
    %v535 = vunpack.c.l.b16 %v33
    %v536 = vunpack.c.h.b16 %v33
    %v537 = vunpack.c.l.b16 %v34
    %v538 = vunpack.c.h.b16 %v34
    %v539 = vunpack.c.l.b16 %v35
    %v540 = vunpack.c.h.b16 %v35
    %v541 = vunpack.c.l.b16 %v36
    %v542 = vunpack.c.h.b16 %v36
    %v543 = vunpack.c.l.b16 %v37
    %v544 = vunpack.c.h.b16 %v37
    %v545 = vunpack.c.l.b16 %v38
    %v546 = vunpack.c.h.b16 %v38
    %v547 = vunpack.c.l.b16 %v39
    %v548 = vunpack.c.h.b16 %v39
    %v549 = vunpack.c.l.b16 %v40
    %v550 = vunpack.c.h.b16 %v40
    %v551 = vunpack.c.l.b16 %v41
    %v552 = vunpack.c.h.b16 %v41
    %v553 = vunpack.c.l.b16 %v42
    %v554 = vunpack.c.h.b16 %v42
    %v555 = vunpack.c.l.b16 %v43
    %v556 = vunpack.c.h.b16 %v43
    %v557 = vunpack.c.l.b16 %v44
    %v558 = vunpack.c.h.b16 %v44
    %v559 = vunpack.c.l.b16 %v45
    %v560 = vunpack.c.h.b16 %v45
    %v561 = vunpack.c.l.b16 %v46
    %v562 = vunpack.c.h.b16 %v46
    %v563 = vunpack.c.l.b16 %v47
    %v564 = vunpack.c.h.b16 %v47
    %v565 = vunpack.c.l.b16 %v48
    %v566 = vunpack.c.h.b16 %v48
    %v567 = vunpack.c.l.b16 %v49
    %v568 = vunpack.c.h.b16 %v49
    %v569 = vunpack.c.l.b16 %v50
    %v570 = vunpack.c.h.b16 %v50
    %v571 = vunpack.c.l.b16 %v51
    %v572 = vunpack.c.h.b16 %v51
    %v573 = vunpack.c.l.b16 %v52
    %v574 = vunpack.c.h.b16 %v52
    %v575 = vunpack.c.l.b16 %v53
    %v576 = vunpack.c.h.b16 %v53
    %v577 = vunpack.c.l.b16 %v54
    %v578 = vunpack.c.h.b16 %v54
    %v579 = vunpack.c.l.b16 %v55
    %v580 = vunpack.c.h.b16 %v55
    %v581 = vunpack.c.l.b16 %v56
    %v582 = vunpack.c.h.b16 %v56
    %v583 = vunpack.c.l.b16 %v57
    %v584 = vunpack.c.h.b16 %v57
    %v585 = vunpack.c.l.b16 %v58
    %v586 = vunpack.c.h.b16 %v58
    %v587 = vunpack.c.l.b16 %v59
    %v588 = vunpack.c.h.b16 %v59
    %v589 = vunpack.c.l.b16 %v60
    %v590 = vunpack.c.h.b16 %v60
    %v591 = vunpack.c.l.b16 %v61
    %v592 = vunpack.c.h.b16 %v61
    %v593 = vunpack.c.l.b16 %v62
    %v594 = vunpack.c.h.b16 %v62
    %v595 = vunpack.c.l.b16 %v63
    %v596 = vunpack.c.h.b16 %v63
    %v597 = vunpack.c.l.b16 %v64
    %v598 = vunpack.c.h.b16 %v64
    %v599 = vunpack.c.l.b16 %v65
    %v600 = vunpack.c.h.b16 %v65
    %v601 = vunpack.c.l.b16 %v66
    %v602 = vunpack.c.h.b16 %v66
    %v603 = vunpack.c.l.b16 %v67
    %v604 = vunpack.c.h.b16 %v67
    %v605 = vunpack.c.l.b16 %v68
    %v606 = vunpack.c.h.b16 %v68
    %v607 = vunpack.c.l.b16 %v69
    %v608 = vunpack.c.h.b16 %v69
    %v609 = vunpack.c.l.b16 %v70
    %v610 = vunpack.c.h.b16 %v70
    %v611 = vunpack.c.l.b16 %v71
    %v612 = vunpack.c.h.b16 %v71
    %v613 = vunpack.c.l.b16 %v72
    %v614 = vunpack.c.h.b16 %v72
    %v615 = vunpack.c.l.b16 %v73
    %v616 = vunpack.c.h.b16 %v73
    %v617 = vunpack.c.l.b16 %v74
    %v618 = vunpack.c.h.b16 %v74
    %v619 = vunpack.c.l.b16 %v75
    %v620 = vunpack.c.h.b16 %v75
    %v621 = vunpack.c.l.b16 %v76
    %v622 = vunpack.c.h.b16 %v76
    %v623 = vunpack.c.l.b16 %v77
    %v624 = vunpack.c.h.b16 %v77
    %v625 = vunpack.c.l.b16 %v78
    %v626 = vunpack.c.h.b16 %v78
    %v627 = vunpack.c.l.b16 %v79
    %v628 = vunpack.c.h.b16 %v79
    %v629 = vunpack.c.l.b16 %v80
    %v630 = vunpack.c.h.b16 %v80
    %v631 = vunpack.c.l.b16 %v81
    %v632 = vunpack.c.h.b16 %v81
    %v633 = vunpack.c.l.b16 %v82
    %v634 = vunpack.c.h.b16 %v82
    %v635 = vunpack.c.l.b16 %v83
    %v636 = vunpack.c.h.b16 %v83
    %v637 = vunpack.c.l.b16 %v84
    %v638 = vunpack.c.h.b16 %v84
    %v639 = vunpack.c.l.b16 %v85
    %v640 = vunpack.c.h.b16 %v85
    %v641 = vunpack.c.l.b16 %v86
    %v642 = vunpack.c.h.b16 %v86
    %v643 = vunpack.c.l.b16 %v87
    %v644 = vunpack.c.h.b16 %v87
    %v645 = vunpack.c.l.b16 %v88
    %v646 = vunpack.c.h.b16 %v88
    %v647 = vunpack.c.l.b16 %v89
    %v648 = vunpack.c.h.b16 %v89
    %v649 = vunpack.c.l.b16 %v90
    %v650 = vunpack.c.h.b16 %v90
    %v651 = vunpack.c.l.b16 %v91
    %v652 = vunpack.c.h.b16 %v91
    %v653 = vunpack.c.l.b16 %v92
    %v654 = vunpack.c.h.b16 %v92
    %v655 = vunpack.c.l.b16 %v93
    %v656 = vunpack.c.h.b16 %v93
    %v657 = vunpack.c.l.b16 %v94
    %v658 = vunpack.c.h.b16 %v94
    %v659 = vunpack.c.l.b16 %v95
    %v660 = vunpack.c.h.b16 %v95
    %v661 = vunpack.c.l.b16 %v96
    %v662 = vunpack.c.h.b16 %v96
    %v663 = vunpack.c.l.b16 %v97
    %v664 = vunpack.c.h.b16 %v97
    %v665 = vunpack.c.l.b16 %v98
    %v666 = vunpack.c.h.b16 %v98
    %v667 = vunpack.c.l.b16 %v99
    %v668 = vunpack.c.h.b16 %v99
    %v669 = vunpack.c.l.b16 %v100
    %v670 = vunpack.c.h.b16 %v100
    %v671 = vunpack.c.l.b16 %v101
    %v672 = vunpack.c.h.b16 %v101
    %v673 = vunpack.c.l.b16 %v102
    %v674 = vunpack.c.h.b16 %v102
    %v675 = vunpack.c.l.b16 %v103
    %v676 = vunpack.c.h.b16 %v103
    %v677 = vunpack.c.l.b16 %v104
    %v678 = vunpack.c.h.b16 %v104
    %v679 = vunpack.c.l.b16 %v105
    %v680 = vunpack.c.h.b16 %v105
    %v681 = vunpack.c.l.b16 %v106
    %v682 = vunpack.c.h.b16 %v106
    %v683 = vunpack.c.l.b16 %v107
    %v684 = vunpack.c.h.b16 %v107
    %v685 = vunpack.c.l.b16 %v108
    %v686 = vunpack.c.h.b16 %v108
    %v687 = vunpack.c.l.b16 %v109
    %v688 = vunpack.c.h.b16 %v109
    %v689 = vunpack.c.l.b16 %v110
    %v690 = vunpack.c.h.b16 %v110
    %v691 = vunpack.c.l.b16 %v111
    %v692 = vunpack.c.h.b16 %v111
    %v693 = vunpack.c.l.b16 %v112
    %v694 = vunpack.c.h.b16 %v112
    %v695 = vunpack.c.l.b16 %v113
    %v696 = vunpack.c.h.b16 %v113
    %v697 = vunpack.c.l.b16 %v114
    %v698 = vunpack.c.h.b16 %v114
    %v699 = vunpack.c.l.b16 %v115
    %v700 = vunpack.c.h.b16 %v115
    %v701 = vunpack.c.l.b16 %v116
    %v702 = vunpack.c.h.b16 %v116
    %v703 = vunpack.c.l.b16 %v117
    %v704 = vunpack.c.h.b16 %v117
    %v705 = vunpack.c.l.b16 %v118
    %v706 = vunpack.c.h.b16 %v118
    %v707 = vunpack.c.l.b16 %v119
    %v708 = vunpack.c.h.b16 %v119
    %v709 = vunpack.c.l.b16 %v120
    %v710 = vunpack.c.h.b16 %v120
    %v711 = vunpack.c.l.b16 %v121
    %v712 = vunpack.c.h.b16 %v121
    %v713 = vunpack.c.l.b16 %v122
    %v714 = vunpack.c.h.b16 %v122
    %v715 = vunpack.c.l.b16 %v123
    %v716 = vunpack.c.h.b16 %v123
    %v717 = vunpack.c.l.b16 %v124
    %v718 = vunpack.c.h.b16 %v124
    %v719 = vunpack.c.l.b16 %v125
    %v720 = vunpack.c.h.b16 %v125
    %v721 = vunpack.c.l.b16 %v126
    %v722 = vunpack.c.h.b16 %v126
    %v723 = vunpack.c.l.b16 %v127
    %v724 = vunpack.c.h.b16 %v127
    %v725 = vunpack.c.l.b16 %v128
    %v726 = vunpack.c.h.b16 %v128
    %v727 = vunpack.c.l.b16 %v129
    %v728 = vunpack.c.h.b16 %v129
    %v729 = vunpack.c.l.b16 %v130
    %v730 = vunpack.c.h.b16 %v130
    %v731 = vunpack.c.l.b16 %v131
    %v732 = vunpack.c.h.b16 %v131
    %v733 = vunpack.c.l.b16 %v132
    %v734 = vunpack.c.h.b16 %v132
    %v735 = vunpack.c.l.b16 %v133
    %v736 = vunpack.c.h.b16 %v133
    %v737 = vunpack.c.l.b16 %v134
    %v738 = vunpack.c.h.b16 %v134
    %v739 = vunpack.c.l.b16 %v135
    %v740 = vunpack.c.h.b16 %v135
    %v741 = vunpack.c.l.b16 %v136
    %v742 = vunpack.c.h.b16 %v136
    %v743 = vunpack.c.l.b16 %v137
    %v744 = vunpack.c.h.b16 %v137
    %v745 = vunpack.c.l.b16 %v138
    %v746 = vunpack.c.h.b16 %v138
    %v747 = vunpack.c.l.b16 %v139
    %v748 = vunpack.c.h.b16 %v139
    %v749 = vunpack.c.l.b16 %v140
    %v750 = vunpack.c.h.b16 %v140
    %v751 = vunpack.c.l.b16 %v141
    %v752 = vunpack.c.h.b16 %v141
    %v753 = vunpack.c.l.b16 %v142
    %v754 = vunpack.c.h.b16 %v142
    %v755 = vunpack.c.l.b16 %v143
    %v756 = vunpack.c.h.b16 %v143
    %v757 = vunpack.c.l.b16 %v144
    %v758 = vunpack.c.h.b16 %v144
    %v759 = vunpack.c.l.b16 %v145
    %v760 = vunpack.c.h.b16 %v145
    %v761 = vunpack.c.l.b16 %v146
    %v762 = vunpack.c.h.b16 %v146
    %v763 = vunpack.c.l.b16 %v147
    %v764 = vunpack.c.h.b16 %v147
    %v765 = vunpack.c.l.b16 %v148
    %v766 = vunpack.c.h.b16 %v148
    %v767 = vunpack.c.l.b16 %v149
    %v768 = vunpack.c.h.b16 %v149
    %v769 = vunpack.c.l.b16 %v150
    %v770 = vunpack.c.h.b16 %v150
    %v771 = vunpack.c.l.b16 %v151
    %v772 = vunpack.c.h.b16 %v151
    %v773 = vunpack.c.l.b16 %v152
    %v774 = vunpack.c.h.b16 %v152
    %v775 = vunpack.c.l.b16 %v153
    %v776 = vunpack.c.h.b16 %v153
    %v777 = vunpack.c.l.b16 %v154
    %v778 = vunpack.c.h.b16 %v154
    %v779 = vunpack.c.l.b16 %v155
    %v780 = vunpack.c.h.b16 %v155
    %v781 = vunpack.c.l.b16 %v156
    %v782 = vunpack.c.h.b16 %v156
    %v783 = vunpack.c.l.b16 %v157
    %v784 = vunpack.c.h.b16 %v157
    %v785 = vunpack.c.l.b16 %v158
    %v786 = vunpack.c.h.b16 %v158
    %v787 = vunpack.c.l.b16 %v159
    %v788 = vunpack.c.h.b16 %v159
    %v789 = vunpack.c.l.b16 %v160
    %v790 = vunpack.c.h.b16 %v160
    %v791 = vunpack.c.l.b16 %v161
    %v792 = vunpack.c.h.b16 %v161
    %v793 = vunpack.c.l.b16 %v162
    %v794 = vunpack.c.h.b16 %v162
    %v795 = vunpack.c.l.b16 %v163
    %v796 = vunpack.c.h.b16 %v163
    %v797 = vunpack.c.l.b16 %v164
    %v798 = vunpack.c.h.b16 %v164
    %v799 = vunpack.c.l.b16 %v165
    %v800 = vunpack.c.h.b16 %v165
    %v801 = vunpack.c.l.b16 %v166
    %v802 = vunpack.c.h.b16 %v166
    %v803 = vunpack.c.l.b16 %v167
    %v804 = vunpack.c.h.b16 %v167
    %v805 = vunpack.c.l.b16 %v168
    %v806 = vunpack.c.h.b16 %v168
    %v807 = vunpack.c.l.b16 %v169
    %v808 = vunpack.c.h.b16 %v169
    %v809 = vunpack.c.l.b16 %v170
    %v810 = vunpack.c.h.b16 %v170
    %v811 = vunpack.c.l.b16 %v171
    %v812 = vunpack.c.h.b16 %v171
    %v813 = vunpack.c.l.b16 %v172
    %v814 = vunpack.c.h.b16 %v172
    %v815 = vunpack.c.l.b16 %v173
    %v816 = vunpack.c.h.b16 %v173
    %v817 = vunpack.c.l.b16 %v174
    %v818 = vunpack.c.h.b16 %v174
    %v819 = vunpack.c.l.b16 %v175
    %v820 = vunpack.c.h.b16 %v175
    %v821 = vunpack.c.l.b16 %v176
    %v822 = vunpack.c.h.b16 %v176
    %v823 = vunpack.c.l.b16 %v177
    %v824 = vunpack.c.h.b16 %v177
    %v825 = vunpack.c.l.b16 %v178
    %v826 = vunpack.c.h.b16 %v178
    %v827 = vunpack.c.l.b16 %v179
    %v828 = vunpack.c.h.b16 %v179
    %v829 = vunpack.c.l.b16 %v180
    %v830 = vunpack.c.h.b16 %v180
    %v831 = vunpack.c.l.b16 %v181
    %v832 = vunpack.c.h.b16 %v181
    %v833 = vunpack.c.l.b16 %v182
    %v834 = vunpack.c.h.b16 %v182
    %v835 = vunpack.c.l.b16 %v183
    %v836 = vunpack.c.h.b16 %v183
    %v837 = vunpack.c.l.b16 %v184
    %v838 = vunpack.c.h.b16 %v184
    %v839 = vunpack.c.l.b16 %v185
    %v840 = vunpack.c.h.b16 %v185
    %v841 = vunpack.c.l.b16 %v186
    %v842 = vunpack.c.h.b16 %v186
    %v843 = vunpack.c.l.b16 %v187
    %v844 = vunpack.c.h.b16 %v187
    %v845 = vunpack.c.l.b16 %v188
    %v846 = vunpack.c.h.b16 %v188
    %v847 = vunpack.c.l.b16 %v189
    %v848 = vunpack.c.h.b16 %v189
    %v849 = vunpack.c.l.b16 %v190
    %v850 = vunpack.c.h.b16 %v190
    %v851 = vunpack.c.l.b16 %v191
    %v852 = vunpack.c.h.b16 %v191
    %v853 = vunpack.c.l.b16 %v192
    %v854 = vunpack.c.h.b16 %v192
    %v855 = vunpack.c.l.b16 %v193
    %v856 = vunpack.c.h.b16 %v193
    %v857 = vunpack.c.l.b16 %v194
    %v858 = vunpack.c.h.b16 %v194
    %v859 = vunpack.c.l.b16 %v195
    %v860 = vunpack.c.h.b16 %v195
    %v861 = vunpack.c.l.b16 %v196
    %v862 = vunpack.c.h.b16 %v196
    %v863 = vunpack.c.l.b16 %v197
    %v864 = vunpack.c.h.b16 %v197
    %v865 = vunpack.c.l.b16 %v198
    %v866 = vunpack.c.h.b16 %v198
    %v867 = vunpack.c.l.b16 %v199
    %v868 = vunpack.c.h.b16 %v199
    %v869 = vunpack.c.l.b16 %v200
    %v870 = vunpack.c.h.b16 %v200
    %v871 = vunpack.c.l.b16 %v201
    %v872 = vunpack.c.h.b16 %v201
    %v873 = vunpack.c.l.b16 %v202
    %v874 = vunpack.c.h.b16 %v202
    %v875 = vunpack.c.l.b16 %v203
    %v876 = vunpack.c.h.b16 %v203
    %v877 = vunpack.c.l.b16 %v204
    %v878 = vunpack.c.h.b16 %v204
    %v879 = vunpack.c.l.b16 %v205
    %v880 = vunpack.c.h.b16 %v205
    %v881 = vunpack.c.l.b16 %v206
    %v882 = vunpack.c.h.b16 %v206
    %v883 = vunpack.c.l.b16 %v207
    %v884 = vunpack.c.h.b16 %v207
    %v885 = vunpack.c.l.b16 %v208
    %v886 = vunpack.c.h.b16 %v208
    %v887 = vunpack.c.l.b16 %v209
    %v888 = vunpack.c.h.b16 %v209
    %v889 = vunpack.c.l.b16 %v210
    %v890 = vunpack.c.h.b16 %v210
    %v891 = vunpack.c.l.b16 %v211
    %v892 = vunpack.c.h.b16 %v211
    %v893 = vunpack.c.l.b16 %v212
    %v894 = vunpack.c.h.b16 %v212
    %v895 = vunpack.c.l.b16 %v213
    %v896 = vunpack.c.h.b16 %v213
    %v897 = vunpack.c.l.b16 %v214
    %v898 = vunpack.c.h.b16 %v214
    %v899 = vunpack.c.l.b16 %v215
    %v900 = vunpack.c.h.b16 %v215
    %v901 = vunpack.c.l.b16 %v216
    %v902 = vunpack.c.h.b16 %v216
    %v903 = vunpack.c.l.b16 %v217
    %v904 = vunpack.c.h.b16 %v217
    %v905 = vunpack.c.l.b16 %v218
    %v906 = vunpack.c.h.b16 %v218
    %v907 = vunpack.c.l.b16 %v219
    %v908 = vunpack.c.h.b16 %v219
    %v909 = vunpack.c.l.b16 %v220
    %v910 = vunpack.c.h.b16 %v220
    %v911 = vunpack.c.l.b16 %v221
    %v912 = vunpack.c.h.b16 %v221
    %v913 = vunpack.c.l.b16 %v222
    %v914 = vunpack.c.h.b16 %v222
    %v915 = vunpack.c.l.b16 %v223
    %v916 = vunpack.c.h.b16 %v223
    %v917 = vunpack.c.l.b16 %v224
    %v918 = vunpack.c.h.b16 %v224
    %v919 = vunpack.c.l.b16 %v225
    %v920 = vunpack.c.h.b16 %v225
    %v921 = vunpack.c.l.b16 %v226
    %v922 = vunpack.c.h.b16 %v226
    %v923 = vunpack.c.l.b16 %v227
    %v924 = vunpack.c.h.b16 %v227
    %v925 = vunpack.c.l.b16 %v228
    %v926 = vunpack.c.h.b16 %v228
    %v927 = vunpack.c.l.b16 %v229
    %v928 = vunpack.c.h.b16 %v229
    %v929 = vunpack.c.l.b16 %v230
    %v930 = vunpack.c.h.b16 %v230
    %v931 = vunpack.c.l.b16 %v231
    %v932 = vunpack.c.h.b16 %v231
    %v933 = vunpack.c.l.b16 %v232
    %v934 = vunpack.c.h.b16 %v232
    %v935 = vunpack.c.l.b16 %v233
    %v936 = vunpack.c.h.b16 %v233
    %v937 = vunpack.c.l.b16 %v234
    %v938 = vunpack.c.h.b16 %v234
    %v939 = vunpack.c.l.b16 %v235
    %v940 = vunpack.c.h.b16 %v235
    %v941 = vunpack.c.l.b16 %v236
    %v942 = vunpack.c.h.b16 %v236
    %v943 = vunpack.c.l.b16 %v237
    %v944 = vunpack.c.h.b16 %v237
    %v945 = vunpack.c.l.b16 %v238
    %v946 = vunpack.c.h.b16 %v238
    %v947 = vunpack.c.l.b16 %v239
    %v948 = vunpack.c.h.b16 %v239
    %v949 = vunpack.c.l.b16 %v240
    %v950 = vunpack.c.h.b16 %v240
    %v951 = vunpack.c.l.b16 %v241
    %v952 = vunpack.c.h.b16 %v241
    %v953 = vunpack.c.l.b16 %v242
    %v954 = vunpack.c.h.b16 %v242
    %v955 = vunpack.c.l.b16 %v243
    %v956 = vunpack.c.h.b16 %v243
    %v957 = vunpack.c.l.b16 %v244
    %v958 = vunpack.c.h.b16 %v244
    %v959 = vunpack.c.l.b16 %v245
    %v960 = vunpack.c.h.b16 %v245
    %v961 = vunpack.c.l.b16 %v246
    %v962 = vunpack.c.h.b16 %v246
    %v963 = vunpack.c.l.b16 %v247
    %v964 = vunpack.c.h.b16 %v247
    %v965 = vunpack.c.l.b16 %v248
    %v966 = vunpack.c.h.b16 %v248
    %v967 = vunpack.c.l.b16 %v249
    %v968 = vunpack.c.h.b16 %v249
    %v969 = vpack.c.b16 %v525, %v521
    %v970 = vpack.c.b16 %v526, %v522
    %v971 = vpack.c.b16 %v527, %v523
    %v972 = vpack.c.b16 %v528, %v524
    %v973 = vpack.c.b16 %v533, %v529
    %v974 = vpack.c.b16 %v534, %v530
    %v975 = vpack.c.b16 %v535, %v531
    %v976 = vpack.c.b16 %v536, %v532
    %v977 = vpack.c.b16 %v541, %v537
    %v978 = vpack.c.b16 %v542, %v538
    %v979 = vpack.c.b16 %v543, %v539
    %v980 = vpack.c.b16 %v544, %v540
    %v981 = vpack.c.b16 %v549, %v545
    %v982 = vpack.c.b16 %v550, %v546
    %v983 = vpack.c.b16 %v551, %v547
    %v984 = vpack.c.b16 %v552, %v548
    %v985 = vpack.c.b16 %v557, %v553
    %v986 = vpack.c.b16 %v558, %v554
    %v987 = vpack.c.b16 %v559, %v555
    %v988 = vpack.c.b16 %v560, %v556
    %v989 = vpack.c.b16 %v565, %v561
    %v990 = vpack.c.b16 %v566, %v562
    %v991 = vpack.c.b16 %v567, %v563
    %v992 = vpack.c.b16 %v568, %v564
    %v993 = vpack.c.b16 %v573, %v569
    %v994 = vpack.c.b16 %v574, %v570
    %v995 = vpack.c.b16 %v575, %v571
    %v996 = vpack.c.b16 %v576, %v572
    %v997 = vpack.c.b16 %v581, %v577
    %v998 = vpack.c.b16 %v582, %v578
    %v999 = vpack.c.b16 %v583, %v579
    %v1000 = vpack.c.b16 %v584, %v580
    %v1001 = vpack.c.b16 %v589, %v585
    %v1002 = vpack.c.b16 %v590, %v586
    %v1003 = vpack.c.b16 %v591, %v587
    %v1004 = vpack.c.b16 %v592, %v588
    %v1005 = vpack.c.b16 %v597, %v593
    %v1006 = vpack.c.b16 %v598, %v594
    %v1007 = vpack.c.b16 %v599, %v595
    %v1008 = vpack.c.b16 %v600, %v596
    %v1009 = vpack.c.b16 %v605, %v601
    %v1010 = vpack.c.b16 %v606, %v602
    %v1011 = vpack.c.b16 %v607, %v603
    %v1012 = vpack.c.b16 %v608, %v604
    %v1013 = vpack.c.b16 %v613, %v609
    %v1014 = vpack.c.b16 %v614, %v610
    %v1015 = vpack.c.b16 %v615, %v611
    %v1016 = vpack.c.b16 %v616, %v612
    %v1017 = vpack.c.b16 %v621, %v617
    %v1018 = vpack.c.b16 %v622, %v618
    %v1019 = vpack.c.b16 %v623, %v619
    %v1020 = vpack.c.b16 %v624, %v620
    %v1021 = vpack.c.b16 %v629, %v625
    %v1022 = vpack.c.b16 %v630, %v626
    %v1023 = vpack.c.b16 %v631, %v627
    %v1024 = vpack.c.b16 %v632, %v628
    %v1025 = vpack.c.b16 %v637, %v633
    %v1026 = vpack.c.b16 %v638, %v634
    %v1027 = vpack.c.b16 %v639, %v635
    %v1028 = vpack.c.b16 %v640, %v636
    %v1029 = vpack.c.b16 %v645, %v641
    %v1030 = vpack.c.b16 %v646, %v642
    %v1031 = vpack.c.b16 %v647, %v643
    %v1032 = vpack.c.b16 %v648, %v644
    %v1033 = vpack.c.b16 %v653, %v649
    %v1034 = vpack.c.b16 %v654, %v650
    %v1035 = vpack.c.b16 %v655, %v651
    %v1036 = vpack.c.b16 %v656, %v652
    %v1037 = vpack.c.b16 %v661, %v657
    %v1038 = vpack.c.b16 %v662, %v658
    %v1039 = vpack.c.b16 %v663, %v659
    %v1040 = vpack.c.b16 %v664, %v660
    %v1041 = vpack.c.b16 %v669, %v665
    %v1042 = vpack.c.b16 %v670, %v666
    %v1043 = vpack.c.b16 %v671, %v667
    %v1044 = vpack.c.b16 %v672, %v668
    %v1045 = vpack.c.b16 %v677, %v673
    %v1046 = vpack.c.b16 %v678, %v674
    %v1047 = vpack.c.b16 %v679, %v675
    %v1048 = vpack.c.b16 %v680, %v676
    %v1049 = vpack.c.b16 %v685, %v681
    %v1050 = vpack.c.b16 %v686, %v682
    %v1051 = vpack.c.b16 %v687, %v683
    %v1052 = vpack.c.b16 %v688, %v684
    %v1053 = vpack.c.b16 %v693, %v689
    %v1054 = vpack.c.b16 %v694, %v690
    %v1055 = vpack.c.b16 %v695, %v691
    %v1056 = vpack.c.b16 %v696, %v692
    %v1057 = vpack.c.b16 %v701, %v697
    %v1058 = vpack.c.b16 %v702, %v698
    %v1059 = vpack.c.b16 %v703, %v699
    %v1060 = vpack.c.b16 %v704, %v700
    %v1061 = vpack.c.b16 %v709, %v705
    %v1062 = vpack.c.b16 %v710, %v706
    %v1063 = vpack.c.b16 %v711, %v707
    %v1064 = vpack.c.b16 %v712, %v708
    %v1065 = vpack.c.b16 %v717, %v713
    %v1066 = vpack.c.b16 %v718, %v714
    %v1067 = vpack.c.b16 %v719, %v715
    %v1068 = vpack.c.b16 %v720, %v716
    %v1069 = vpack.c.b16 %v725, %v721
    %v1070 = vpack.c.b16 %v726, %v722
    %v1071 = vpack.c.b16 %v727, %v723
    %v1072 = vpack.c.b16 %v728, %v724
    %v1073 = vpack.c.b16 %v733, %v729
    %v1074 = vpack.c.b16 %v734, %v730
    %v1075 = vpack.c.b16 %v735, %v731
    %v1076 = vpack.c.b16 %v736, %v732
    %v1077 = vpack.c.b16 %v741, %v737
    %v1078 = vpack.c.b16 %v742, %v738
    %v1079 = vpack.c.b16 %v743, %v739
    %v1080 = vpack.c.b16 %v744, %v740
    %v1081 = vpack.c.b16 %v749, %v745
    %v1082 = vpack.c.b16 %v750, %v746
    %v1083 = vpack.c.b16 %v751, %v747
    %v1084 = vpack.c.b16 %v752, %v748
    %v1085 = vpack.c.b16 %v757, %v753
    %v1086 = vpack.c.b16 %v758, %v754
    %v1087 = vpack.c.b16 %v759, %v755
    %v1088 = vpack.c.b16 %v760, %v756
    %v1089 = vpack.c.b16 %v765, %v761
    %v1090 = vpack.c.b16 %v766, %v762
    %v1091 = vpack.c.b16 %v767, %v763
    %v1092 = vpack.c.b16 %v768, %v764
    %v1093 = vpack.c.b16 %v773, %v769
    %v1094 = vpack.c.b16 %v774, %v770
    %v1095 = vpack.c.b16 %v775, %v771
    %v1096 = vpack.c.b16 %v776, %v772
    %v1097 = vpack.c.b16 %v781, %v777
    %v1098 = vpack.c.b16 %v782, %v778
    %v1099 = vpack.c.b16 %v783, %v779
    %v1100 = vpack.c.b16 %v784, %v780
    %v1101 = vpack.c.b16 %v789, %v785
    %v1102 = vpack.c.b16 %v790, %v786
    %v1103 = vpack.c.b16 %v791, %v787
    %v1104 = vpack.c.b16 %v792, %v788
    %v1105 = vpack.c.b16 %v797, %v793
    %v1106 = vpack.c.b16 %v798, %v794
    %v1107 = vpack.c.b16 %v799, %v795
    %v1108 = vpack.c.b16 %v800, %v796
    %v1109 = vpack.c.b16 %v805, %v801
    %v1110 = vpack.c.b16 %v806, %v802
    %v1111 = vpack.c.b16 %v807, %v803
    %v1112 = vpack.c.b16 %v808, %v804
    %v1113 = vpack.c.b16 %v813, %v809
    %v1114 = vpack.c.b16 %v814, %v810
    %v1115 = vpack.c.b16 %v815, %v811
    %v1116 = vpack.c.b16 %v816, %v812
    %v1117 = vpack.c.b16 %v821, %v817
    %v1118 = vpack.c.b16 %v822, %v818
    %v1119 = vpack.c.b16 %v823, %v819
    %v1120 = vpack.c.b16 %v824, %v820
    %v1121 = vpack.c.b16 %v829, %v825
    %v1122 = vpack.c.b16 %v830, %v826
    %v1123 = vpack.c.b16 %v831, %v827
    %v1124 = vpack.c.b16 %v832, %v828
    %v1125 = vpack.c.b16 %v837, %v833
    %v1126 = vpack.c.b16 %v838, %v834
    %v1127 = vpack.c.b16 %v839, %v835
    %v1128 = vpack.c.b16 %v840, %v836
    %v1129 = vpack.c.b16 %v845, %v841
    %v1130 = vpack.c.b16 %v846, %v842
    %v1131 = vpack.c.b16 %v847, %v843
    %v1132 = vpack.c.b16 %v848, %v844
    %v1133 = vpack.c.b16 %v853, %v849
    %v1134 = vpack.c.b16 %v854, %v850
    %v1135 = vpack.c.b16 %v855, %v851
    %v1136 = vpack.c.b16 %v856, %v852
    %v1137 = vpack.c.b16 %v861, %v857
    %v1138 = vpack.c.b16 %v862, %v858
    %v1139 = vpack.c.b16 %v863, %v859
    %v1140 = vpack.c.b16 %v864, %v860
    %v1141 = vpack.c.b16 %v869, %v865
    %v1142 = vpack.c.b16 %v870, %v866
    %v1143 = vpack.c.b16 %v871, %v867
    %v1144 = vpack.c.b16 %v872, %v868
    %v1145 = vpack.c.b16 %v877, %v873
    %v1146 = vpack.c.b16 %v878, %v874
    %v1147 = vpack.c.b16 %v879, %v875
    %v1148 = vpack.c.b16 %v880, %v876
    %v1149 = vpack.c.b16 %v885, %v881
    %v1150 = vpack.c.b16 %v886, %v882
    %v1151 = vpack.c.b16 %v887, %v883
    %v1152 = vpack.c.b16 %v888, %v884
    %v1153 = vpack.c.b16 %v893, %v889
    %v1154 = vpack.c.b16 %v894, %v890
    %v1155 = vpack.c.b16 %v895, %v891
    %v1156 = vpack.c.b16 %v896, %v892
    %v1157 = vpack.c.b16 %v901, %v897
    %v1158 = vpack.c.b16 %v902, %v898
    %v1159 = vpack.c.b16 %v903, %v899
    %v1160 = vpack.c.b16 %v904, %v900
    %v1161 = vpack.c.b16 %v909, %v905
    %v1162 = vpack.c.b16 %v910, %v906
    %v1163 = vpack.c.b16 %v911, %v907
    %v1164 = vpack.c.b16 %v912, %v908
    %v1165 = vpack.c.b16 %v917, %v913
    %v1166 = vpack.c.b16 %v918, %v914
    %v1167 = vpack.c.b16 %v919, %v915
    %v1168 = vpack.c.b16 %v920, %v916
    %v1169 = vpack.c.b16 %v925, %v921
    %v1170 = vpack.c.b16 %v926, %v922
    %v1171 = vpack.c.b16 %v927, %v923
    %v1172 = vpack.c.b16 %v928, %v924
    %v1173 = vpack.c.b16 %v933, %v929
    %v1174 = vpack.c.b16 %v934, %v930
    %v1175 = vpack.c.b16 %v935, %v931
    %v1176 = vpack.c.b16 %v936, %v932
    %v1177 = vpack.c.b16 %v941, %v937
    %v1178 = vpack.c.b16 %v942, %v938
    %v1179 = vpack.c.b16 %v943, %v939
    %v1180 = vpack.c.b16 %v944, %v940
    %v1181 = vpack.c.b16 %v949, %v945
    %v1182 = vpack.c.b16 %v950, %v946
    %v1183 = vpack.c.b16 %v951, %v947
    %v1184 = vpack.c.b16 %v952, %v948
    %v1185 = vpack.c.b16 %v957, %v953
    %v1186 = vpack.c.b16 %v958, %v954
    %v1187 = vpack.c.b16 %v959, %v955
    %v1188 = vpack.c.b16 %v960, %v956
    %v1189 = vpack.c.b16 %v965, %v961
    %v1190 = vpack.c.b16 %v966, %v962
    %v1191 = vpack.c.b16 %v967, %v963
    %v1192 = vpack.c.b16 %v968, %v964
    %1417 = vmatprep.subr.bf16.mxu0 %v970
    %1418 = vmatpush1.bf16.msra.mxu0 %v969
    %1419 = vmatprep.subr.bf16.mxu0 %v974
    %1420 = vmatpush1.bf16.msra.mxu0 %v973
    %1421 = vmatprep.subr.bf16.mxu0 %v978
    %1422 = vmatpush1.bf16.msra.mxu0 %v977
    %1423 = vmatprep.subr.bf16.mxu0 %v982
    %1424 = vmatpush1.bf16.msra.mxu0 %v981
    %1425 = vmatprep.subr.bf16.mxu0 %v986
    %1426 = vmatpush1.bf16.msra.mxu0 %v985
    %1427 = vmatprep.subr.bf16.mxu0 %v990
    %1428 = vmatpush1.bf16.msra.mxu0 %v989
    %1429 = vmatprep.subr.bf16.mxu0 %v994
    %1430 = vmatpush1.bf16.msra.mxu0 %v993
    %1431 = vmatprep.subr.bf16.mxu0 %v998
    %1432 = vmatpush1.bf16.msra.mxu0 %v997
    %1433 = vmatprep.subr.bf16.mxu0 %v1002
    %1434 = vmatpush1.bf16.msra.mxu0 %v1001
    %1435 = vmatprep.subr.bf16.mxu0 %v1006
    %1436 = vmatpush1.bf16.msra.mxu0 %v1005
    %1437 = vmatprep.subr.bf16.mxu0 %v1010
    %1438 = vmatpush1.bf16.msra.mxu0 %v1009
    %1439 = vmatprep.subr.bf16.mxu0 %v1014
    %1440 = vmatpush1.bf16.msra.mxu0 %v1013
    %1441 = vmatprep.subr.bf16.mxu0 %v1018
    %1442 = vmatpush1.bf16.msra.mxu0 %v1017
    %1443 = vmatprep.subr.bf16.mxu0 %v1022
    %1444 = vmatpush1.bf16.msra.mxu0 %v1021
    %1445 = vmatprep.subr.bf16.mxu0 %v1026
    %1446 = vmatpush1.bf16.msra.mxu0 %v1025
    %1447 = vmatprep.subr.bf16.mxu0 %v1030
    %1448 = vmatpush1.bf16.msra.mxu0 %v1029
    %1449 = vmatprep.mubr.bf16.mxu0 %v284
    %1450 = vmatmul.mubr.bf16.gmra.mrb[0].mxu0 %v283
    %v1451 = vpop.f32.mrb[0].mxu0
    %v1452 = vadd.f32 %v255, %v1451
    %v1453 = vpop.f32.mrb[0].mxu0
    %v1454 = vadd.f32 %v259, %v1453
    %v1455 = vpop.f32.mrb[0].mxu0
    %v1456 = vpop.f32.mrb[0].mxu0
    %1457 = vdwg.mxu0
    %1458 = vmatprep.subr.bf16.mxu0 %v1034
    %1459 = vmatpush1.bf16.msra.mxu0 %v1033
    %1460 = vmatprep.subr.bf16.mxu0 %v1038
    %1461 = vmatpush1.bf16.msra.mxu0 %v1037
    %1462 = vmatprep.subr.bf16.mxu0 %v1042
    %1463 = vmatpush1.bf16.msra.mxu0 %v1041
    %1464 = vmatprep.subr.bf16.mxu0 %v1046
    %1465 = vmatpush1.bf16.msra.mxu0 %v1045
    %1466 = vmatprep.subr.bf16.mxu0 %v1050
    %1467 = vmatpush1.bf16.msra.mxu0 %v1049
    %1468 = vmatprep.subr.bf16.mxu0 %v1054
    %1469 = vmatpush1.bf16.msra.mxu0 %v1053
    %1470 = vmatprep.subr.bf16.mxu0 %v1058
    %1471 = vmatpush1.bf16.msra.mxu0 %v1057
    %1472 = vmatprep.subr.bf16.mxu0 %v1062
    %1473 = vmatpush1.bf16.msra.mxu0 %v1061
    %1474 = vmatprep.subr.bf16.mxu0 %v1066
    %1475 = vmatpush1.bf16.msra.mxu0 %v1065
    %1476 = vmatprep.subr.bf16.mxu0 %v1070
    %1477 = vmatpush1.bf16.msra.mxu0 %v1069
    %1478 = vmatprep.subr.bf16.mxu0 %v1074
    %1479 = vmatpush1.bf16.msra.mxu0 %v1073
    %1480 = vmatprep.subr.bf16.mxu0 %v1078
    %1481 = vmatpush1.bf16.msra.mxu0 %v1077
    %1482 = vmatprep.subr.bf16.mxu0 %v1082
    %1483 = vmatpush1.bf16.msra.mxu0 %v1081
    %1484 = vmatprep.subr.bf16.mxu0 %v1086
    %1485 = vmatpush1.bf16.msra.mxu0 %v1085
    %1486 = vmatprep.subr.bf16.mxu0 %v1090
    %1487 = vmatpush1.bf16.msra.mxu0 %v1089
    %1488 = vmatprep.subr.bf16.mxu0 %v1094
    %1489 = vmatpush1.bf16.msra.mxu0 %v1093
    %1490 = vmatprep.mubr.bf16.mxu0 %v286
    %1491 = vmatmul.mubr.bf16.gmra.mrb[0].mxu0 %v285
    %v1492 = vpop.f32.mrb[0].mxu0
    %v1493 = vadd.f32 %v1452, %v1492
    %v1494 = vpop.f32.mrb[0].mxu0
    %v1495 = vadd.f32 %v1454, %v1494
    %v1496 = vpop.f32.mrb[0].mxu0
    %v1497 = vpop.f32.mrb[0].mxu0
    %1498 = vdwg.mxu0
    %1499 = vmatprep.subr.bf16.mxu0 %v1098
    %1500 = vmatpush1.bf16.msra.mxu0 %v1097
    %1501 = vmatprep.subr.bf16.mxu0 %v1102
    %1502 = vmatpush1.bf16.msra.mxu0 %v1101
    %1503 = vmatprep.subr.bf16.mxu0 %v1106
    %1504 = vmatpush1.bf16.msra.mxu0 %v1105
    %1505 = vmatprep.subr.bf16.mxu0 %v1110
    %1506 = vmatpush1.bf16.msra.mxu0 %v1109
    %1507 = vmatprep.subr.bf16.mxu0 %v1114
    %1508 = vmatpush1.bf16.msra.mxu0 %v1113
    %1509 = vmatprep.subr.bf16.mxu0 %v1118
    %1510 = vmatpush1.bf16.msra.mxu0 %v1117
    %1511 = vmatprep.subr.bf16.mxu0 %v1122
    %1512 = vmatpush1.bf16.msra.mxu0 %v1121
    %1513 = vmatprep.subr.bf16.mxu0 %v1126
    %1514 = vmatpush1.bf16.msra.mxu0 %v1125
    %1515 = vmatprep.subr.bf16.mxu0 %v1130
    %1516 = vmatpush1.bf16.msra.mxu0 %v1129
    %1517 = vmatprep.subr.bf16.mxu0 %v1134
    %1518 = vmatpush1.bf16.msra.mxu0 %v1133
    %1519 = vmatprep.subr.bf16.mxu0 %v1138
    %1520 = vmatpush1.bf16.msra.mxu0 %v1137
    %1521 = vmatprep.subr.bf16.mxu0 %v1142
    %1522 = vmatpush1.bf16.msra.mxu0 %v1141
    %1523 = vmatprep.subr.bf16.mxu0 %v1146
    %1524 = vmatpush1.bf16.msra.mxu0 %v1145
    %1525 = vmatprep.subr.bf16.mxu0 %v1150
    %1526 = vmatpush1.bf16.msra.mxu0 %v1149
    %1527 = vmatprep.subr.bf16.mxu0 %v1154
    %1528 = vmatpush1.bf16.msra.mxu0 %v1153
    %1529 = vmatprep.subr.bf16.mxu0 %v1158
    %1530 = vmatpush1.bf16.msra.mxu0 %v1157
    %1531 = vmatprep.mubr.bf16.mxu0 %v288
    %1532 = vmatmul.mubr.bf16.gmra.mrb[0].mxu0 %v287
    %v1533 = vpop.f32.mrb[0].mxu0
    %v1534 = vadd.f32 %v1493, %v1533
    %v1535 = vpop.f32.mrb[0].mxu0
    %v1536 = vadd.f32 %v1495, %v1535
    %v1537 = vpop.f32.mrb[0].mxu0
    %v1538 = vpop.f32.mrb[0].mxu0
    %1539 = vdwg.mxu0
    %1540 = vmatprep.subr.bf16.mxu0 %v1162
    %1541 = vmatpush1.bf16.msra.mxu0 %v1161
    %1542 = vmatprep.subr.bf16.mxu0 %v1166
    %1543 = vmatpush1.bf16.msra.mxu0 %v1165
    %1544 = vmatprep.subr.bf16.mxu0 %v1170
    %1545 = vmatpush1.bf16.msra.mxu0 %v1169
    %1546 = vmatprep.subr.bf16.mxu0 %v1174
    %1547 = vmatpush1.bf16.msra.mxu0 %v1173
    %1548 = vmatprep.subr.bf16.mxu0 %v1178
    %1549 = vmatpush1.bf16.msra.mxu0 %v1177
    %1550 = vmatprep.subr.bf16.mxu0 %v1182
    %1551 = vmatpush1.bf16.msra.mxu0 %v1181
    %1552 = vmatprep.subr.bf16.mxu0 %v1186
    %1553 = vmatpush1.bf16.msra.mxu0 %v1185
    %1554 = vmatprep.subr.bf16.mxu0 %v1190
    %1555 = vmatpush1.bf16.msra.mxu0 %v1189
    %1556 = vmatprep.subr.bf16.mxu0 0
    %1557 = vmatpush1.bf16.msra.mxu0 0
    %1558 = vmatprep.subr.bf16.mxu0 0
    %1559 = vmatpush1.bf16.msra.mxu0 0
    %1560 = vmatprep.subr.bf16.mxu0 0
    %1561 = vmatpush1.bf16.msra.mxu0 0
    %1562 = vmatprep.subr.bf16.mxu0 0
    %1563 = vmatpush1.bf16.msra.mxu0 0
    %1564 = vmatprep.subr.bf16.mxu0 0
    %1565 = vmatpush1.bf16.msra.mxu0 0
    %1566 = vmatprep.subr.bf16.mxu0 0
    %1567 = vmatpush1.bf16.msra.mxu0 0
    %1568 = vmatprep.subr.bf16.mxu0 0
    %1569 = vmatpush1.bf16.msra.mxu0 0
    %1570 = vmatprep.subr.bf16.mxu0 0
    %1571 = vmatpush1.bf16.msra.mxu0 0
    %1572 = vmatprep.mubr.bf16.mxu0 0
    %1573 = vmatmul.mubr.bf16.gmra.mrb[0].mxu0 %v289
    %v1574 = vpop.f32.mrb[0].mxu0
    %v1575 = vadd.f32 %v1534, %v1574
    %v1576 = vpop.f32.mrb[0].mxu0
    %v1577 = vadd.f32 %v1536, %v1576
    %v1578 = vpop.f32.mrb[0].mxu0
    %v1579 = vpop.f32.mrb[0].mxu0
    %1580 = vdwg.mxu0
    %1581 = vmatprep.subr.bf16.mxu0 %v972
    %1582 = vmatpush1.bf16.msra.mxu0 %v971
    %1583 = vmatprep.subr.bf16.mxu0 %v976
    %1584 = vmatpush1.bf16.msra.mxu0 %v975
    %1585 = vmatprep.subr.bf16.mxu0 %v980
    %1586 = vmatpush1.bf16.msra.mxu0 %v979
    %1587 = vmatprep.subr.bf16.mxu0 %v984
    %1588 = vmatpush1.bf16.msra.mxu0 %v983
    %1589 = vmatprep.subr.bf16.mxu0 %v988
    %1590 = vmatpush1.bf16.msra.mxu0 %v987
    %1591 = vmatprep.subr.bf16.mxu0 %v992
    %1592 = vmatpush1.bf16.msra.mxu0 %v991
    %1593 = vmatprep.subr.bf16.mxu0 %v996
    %1594 = vmatpush1.bf16.msra.mxu0 %v995
    %1595 = vmatprep.subr.bf16.mxu0 %v1000
    %1596 = vmatpush1.bf16.msra.mxu0 %v999
    %1597 = vmatprep.subr.bf16.mxu0 %v1004
    %1598 = vmatpush1.bf16.msra.mxu0 %v1003
    %1599 = vmatprep.subr.bf16.mxu0 %v1008
    %1600 = vmatpush1.bf16.msra.mxu0 %v1007
    %1601 = vmatprep.subr.bf16.mxu0 %v1012
    %1602 = vmatpush1.bf16.msra.mxu0 %v1011
    %1603 = vmatprep.subr.bf16.mxu0 %v1016
    %1604 = vmatpush1.bf16.msra.mxu0 %v1015
    %1605 = vmatprep.subr.bf16.mxu0 %v1020
    %1606 = vmatpush1.bf16.msra.mxu0 %v1019
    %1607 = vmatprep.subr.bf16.mxu0 %v1024
    %1608 = vmatpush1.bf16.msra.mxu0 %v1023
    %1609 = vmatprep.subr.bf16.mxu0 %v1028
    %1610 = vmatpush1.bf16.msra.mxu0 %v1027
    %1611 = vmatprep.subr.bf16.mxu0 %v1032
    %1612 = vmatpush1.bf16.msra.mxu0 %v1031
    %1613 = vmatprep.mubr.bf16.mxu0 %v284
    %1614 = vmatmul.mubr.bf16.gmra.mrb[0].mxu0 %v283
    %v1615 = vpop.f32.mrb[0].mxu0
    %v1616 = vadd.f32 %v263, %v1615
    %v1617 = vpop.f32.mrb[0].mxu0
    %v1618 = vadd.f32 %v267, %v1617
    %v1619 = vpop.f32.mrb[0].mxu0
    %v1620 = vpop.f32.mrb[0].mxu0
    %1621 = vdwg.mxu0
    %1622 = vmatprep.subr.bf16.mxu0 %v1036
    %1623 = vmatpush1.bf16.msra.mxu0 %v1035
    %1624 = vmatprep.subr.bf16.mxu0 %v1040
    %1625 = vmatpush1.bf16.msra.mxu0 %v1039
    %1626 = vmatprep.subr.bf16.mxu0 %v1044
    %1627 = vmatpush1.bf16.msra.mxu0 %v1043
    %1628 = vmatprep.subr.bf16.mxu0 %v1048
    %1629 = vmatpush1.bf16.msra.mxu0 %v1047
    %1630 = vmatprep.subr.bf16.mxu0 %v1052
    %1631 = vmatpush1.bf16.msra.mxu0 %v1051
    %1632 = vmatprep.subr.bf16.mxu0 %v1056
    %1633 = vmatpush1.bf16.msra.mxu0 %v1055
    %1634 = vmatprep.subr.bf16.mxu0 %v1060
    %1635 = vmatpush1.bf16.msra.mxu0 %v1059
    %1636 = vmatprep.subr.bf16.mxu0 %v1064
    %1637 = vmatpush1.bf16.msra.mxu0 %v1063
    %1638 = vmatprep.subr.bf16.mxu0 %v1068
    %1639 = vmatpush1.bf16.msra.mxu0 %v1067
    %1640 = vmatprep.subr.bf16.mxu0 %v1072
    %1641 = vmatpush1.bf16.msra.mxu0 %v1071
    %1642 = vmatprep.subr.bf16.mxu0 %v1076
    %1643 = vmatpush1.bf16.msra.mxu0 %v1075
    %1644 = vmatprep.subr.bf16.mxu0 %v1080
    %1645 = vmatpush1.bf16.msra.mxu0 %v1079
    %1646 = vmatprep.subr.bf16.mxu0 %v1084
    %1647 = vmatpush1.bf16.msra.mxu0 %v1083
    %1648 = vmatprep.subr.bf16.mxu0 %v1088
    %1649 = vmatpush1.bf16.msra.mxu0 %v1087
    %1650 = vmatprep.subr.bf16.mxu0 %v1092
    %1651 = vmatpush1.bf16.msra.mxu0 %v1091
    %1652 = vmatprep.subr.bf16.mxu0 %v1096
    %1653 = vmatpush1.bf16.msra.mxu0 %v1095
    %1654 = vmatprep.mubr.bf16.mxu0 %v286
    %1655 = vmatmul.mubr.bf16.gmra.mrb[0].mxu0 %v285
    %v1656 = vpop.f32.mrb[0].mxu0
    %v1657 = vadd.f32 %v1616, %v1656
    %v1658 = vpop.f32.mrb[0].mxu0
    %v1659 = vadd.f32 %v1618, %v1658
    %v1660 = vpop.f32.mrb[0].mxu0
    %v1661 = vpop.f32.mrb[0].mxu0
    %1662 = vdwg.mxu0
    %1663 = vmatprep.subr.bf16.mxu0 %v1100
    %1664 = vmatpush1.bf16.msra.mxu0 %v1099
    %1665 = vmatprep.subr.bf16.mxu0 %v1104
    %1666 = vmatpush1.bf16.msra.mxu0 %v1103
    %1667 = vmatprep.subr.bf16.mxu0 %v1108
    %1668 = vmatpush1.bf16.msra.mxu0 %v1107
    %1669 = vmatprep.subr.bf16.mxu0 %v1112
    %1670 = vmatpush1.bf16.msra.mxu0 %v1111
    %1671 = vmatprep.subr.bf16.mxu0 %v1116
    %1672 = vmatpush1.bf16.msra.mxu0 %v1115
    %1673 = vmatprep.subr.bf16.mxu0 %v1120
    %1674 = vmatpush1.bf16.msra.mxu0 %v1119
    %1675 = vmatprep.subr.bf16.mxu0 %v1124
    %1676 = vmatpush1.bf16.msra.mxu0 %v1123
    %1677 = vmatprep.subr.bf16.mxu0 %v1128
    %1678 = vmatpush1.bf16.msra.mxu0 %v1127
    %1679 = vmatprep.subr.bf16.mxu0 %v1132
    %1680 = vmatpush1.bf16.msra.mxu0 %v1131
    %1681 = vmatprep.subr.bf16.mxu0 %v1136
    %1682 = vmatpush1.bf16.msra.mxu0 %v1135
    %1683 = vmatprep.subr.bf16.mxu0 %v1140
    %1684 = vmatpush1.bf16.msra.mxu0 %v1139
    %1685 = vmatprep.subr.bf16.mxu0 %v1144
    %1686 = vmatpush1.bf16.msra.mxu0 %v1143
    %1687 = vmatprep.subr.bf16.mxu0 %v1148
    %1688 = vmatpush1.bf16.msra.mxu0 %v1147
    %1689 = vmatprep.subr.bf16.mxu0 %v1152
    %1690 = vmatpush1.bf16.msra.mxu0 %v1151
    %1691 = vmatprep.subr.bf16.mxu0 %v1156
    %1692 = vmatpush1.bf16.msra.mxu0 %v1155
    %1693 = vmatprep.subr.bf16.mxu0 %v1160
    %1694 = vmatpush1.bf16.msra.mxu0 %v1159
    %1695 = vmatprep.mubr.bf16.mxu0 %v288
    %1696 = vmatmul.mubr.bf16.gmra.mrb[0].mxu0 %v287
    %v1697 = vpop.f32.mrb[0].mxu0
    %v1698 = vadd.f32 %v1657, %v1697
    %v1699 = vpop.f32.mrb[0].mxu0
    %v1700 = vadd.f32 %v1659, %v1699
    %v1701 = vpop.f32.mrb[0].mxu0
    %v1702 = vpop.f32.mrb[0].mxu0
    %1703 = vdwg.mxu0
    %1704 = vmatprep.subr.bf16.mxu0 %v1164
    %1705 = vmatpush1.bf16.msra.mxu0 %v1163
    %1706 = vmatprep.subr.bf16.mxu0 %v1168
    %1707 = vmatpush1.bf16.msra.mxu0 %v1167
    %1708 = vmatprep.subr.bf16.mxu0 %v1172
    %1709 = vmatpush1.bf16.msra.mxu0 %v1171
    %1710 = vmatprep.subr.bf16.mxu0 %v1176
    %1711 = vmatpush1.bf16.msra.mxu0 %v1175
    %1712 = vmatprep.subr.bf16.mxu0 %v1180
    %1713 = vmatpush1.bf16.msra.mxu0 %v1179
    %1714 = vmatprep.subr.bf16.mxu0 %v1184
    %1715 = vmatpush1.bf16.msra.mxu0 %v1183
    %1716 = vmatprep.subr.bf16.mxu0 %v1188
    %1717 = vmatpush1.bf16.msra.mxu0 %v1187
    %1718 = vmatprep.subr.bf16.mxu0 %v1192
    %1719 = vmatpush1.bf16.msra.mxu0 %v1191
    %1720 = vmatprep.subr.bf16.mxu0 0
    %1721 = vmatpush1.bf16.msra.mxu0 0
    %1722 = vmatprep.subr.bf16.mxu0 0
    %1723 = vmatpush1.bf16.msra.mxu0 0
    %1724 = vmatprep.subr.bf16.mxu0 0
    %1725 = vmatpush1.bf16.msra.mxu0 0
    %1726 = vmatprep.subr.bf16.mxu0 0
    %1727 = vmatpush1.bf16.msra.mxu0 0
    %1728 = vmatprep.subr.bf16.mxu0 0
    %1729 = vmatpush1.bf16.msra.mxu0 0
    %1730 = vmatprep.subr.bf16.mxu0 0
    %1731 = vmatpush1.bf16.msra.mxu0 0
    %1732 = vmatprep.subr.bf16.mxu0 0
    %1733 = vmatpush1.bf16.msra.mxu0 0
    %1734 = vmatprep.subr.bf16.mxu0 0
    %1735 = vmatpush1.bf16.msra.mxu0 0
    %1736 = vmatprep.mubr.bf16.mxu0 0
    %1737 = vmatmul.mubr.bf16.gmra.mrb[0].mxu0 %v289
    %v1738 = vpop.f32.mrb[0].mxu0
    %v1739 = vadd.f32 %v1698, %v1738
    %v1740 = vpop.f32.mrb[0].mxu0
    %v1741 = vadd.f32 %v1700, %v1740
    %v1742 = vpop.f32.mrb[0].mxu0
    %v1743 = vpop.f32.mrb[0].mxu0
    %1744 = vdwg.mxu0
    %v1745 = vmax.f32 %v1575, 0.0
    %v1746 = vmax.f32 %v1577, 0.0
    %v1747 = vmax.f32 %v1739, 0.0
    %v1748 = vmax.f32 %v1741, 0.0
    %v1749 = vpack.c.bf16 %v1745, %v1745
    %v1750 = vpack.c.bf16 %v1746, %v1746
    %v1751 = vpack.c.bf16 %v1747, %v1747
    %v1752 = vpack.c.bf16 %v1748, %v1748
    %v1753 = vld [vmem:[%s3] sm:$0xf]
    %v1754 = vld [vmem:[%s3 + $0x4] sm:$0xf]
    %v1755 = vld [vmem:[%s3 + $0x8] sm:$0xf]
    %v1756 = vld [vmem:[%s3 + $0xc] sm:$0xf]
    %v1757 = vld [vmem:[%s3 + $0x10] sm:$0xf]
    %v1758 = vld [vmem:[%s3 + $0x14] sm:$0xf]
    %v1759 = vld [vmem:[%s3 + $0x18] sm:$0xf]
    %v1760 = vld [vmem:[%s3 + $0x1c] sm:$0xf]
    %v1761 = vld [vmem:[%s3 + $0x20] sm:$0xf]
    %v1762 = vld [vmem:[%s3 + $0x24] sm:$0xf]
    %v1763 = vld [vmem:[%s3 + $0x28] sm:$0xf]
    %v1764 = vld [vmem:[%s3 + $0x2c] sm:$0xf]
    %v1765 = vld [vmem:[%s3 + $0x30] sm:$0xf]
    %v1766 = vld [vmem:[%s3 + $0x34] sm:$0xf]
    %v1767 = vld [vmem:[%s3 + $0x38] sm:$0xf]
    %v1768 = vld [vmem:[%s3 + $0x3c] sm:$0xf]
    %v1769 = vld [vmem:[%s3 + $0x40] sm:$0xf]
    %v1770 = vld [vmem:[%s3 + $0x44] sm:$0xf]
    %v1771 = vld [vmem:[%s3 + $0x48] sm:$0xf]
    %v1772 = vld [vmem:[%s3 + $0x4c] sm:$0xf]
    %v1773 = vld [vmem:[%s3 + $0x50] sm:$0xf]
    %v1774 = vld [vmem:[%s3 + $0x54] sm:$0xf]
    %v1775 = vld [vmem:[%s3 + $0x58] sm:$0xf]
    %v1776 = vld [vmem:[%s3 + $0x5c] sm:$0xf]
    %v1777 = vld [vmem:[%s3 + $0x60] sm:$0xf]
    %v1778 = vld [vmem:[%s3 + $0x64] sm:$0xf]
    %v1779 = vld [vmem:[%s3 + $0x68] sm:$0xf]
    %v1780 = vld [vmem:[%s3 + $0x6c] sm:$0xf]
    %v1781 = vld [vmem:[%s3 + $0x70] sm:$0xf]
    %v1782 = vld [vmem:[%s3 + $0x74] sm:$0xf]
    %v1783 = vld [vmem:[%s3 + $0x78] sm:$0xf]
    %v1784 = vld [vmem:[%s3 + $0x7c] sm:$0xf]
    %v1785 = vld [vmem:[%s3 + $0x80] sm:$0xf]
    %v1786 = vld [vmem:[%s3 + $0x84] sm:$0xf]
    %v1787 = vld [vmem:[%s3 + $0x88] sm:$0xf]
    %v1788 = vld [vmem:[%s3 + $0x8c] sm:$0xf]
    %v1789 = vld [vmem:[%s3 + $0x90] sm:$0xf]
    %v1790 = vld [vmem:[%s3 + $0x94] sm:$0xf]
    %v1791 = vld [vmem:[%s3 + $0x98] sm:$0xf]
    %v1792 = vld [vmem:[%s3 + $0x9c] sm:$0xf]
    %v1793 = vld [vmem:[%s3 + $0xa0] sm:$0xf]
    %v1794 = vld [vmem:[%s3 + $0xa4] sm:$0xf]
    %v1795 = vld [vmem:[%s3 + $0xa8] sm:$0xf]
    %v1796 = vld [vmem:[%s3 + $0xac] sm:$0xf]
    %v1797 = vld [vmem:[%s3 + $0xb0] sm:$0xf]
    %v1798 = vld [vmem:[%s3 + $0xb4] sm:$0xf]
    %v1799 = vld [vmem:[%s3 + $0xb8] sm:$0xf]
    %v1800 = vld [vmem:[%s3 + $0xbc] sm:$0xf]
    %v1801 = vld [vmem:[%s3 + $0xc0] sm:$0xf]
    %v1802 = vld [vmem:[%s3 + $0xc4] sm:$0xf]
    %v1803 = vld [vmem:[%s3 + $0xc8] sm:$0xf]
    %v1804 = vld [vmem:[%s3 + $0xcc] sm:$0xf]
    %v1805 = vld [vmem:[%s3 + $0xd0] sm:$0xf]
    %v1806 = vld [vmem:[%s3 + $0xd4] sm:$0xf]
    %v1807 = vld [vmem:[%s3 + $0xd8] sm:$0xf]
    %v1808 = vld [vmem:[%s3 + $0xdc] sm:$0xf]
    %v1809 = vld [vmem:[%s3 + $0xe0] sm:$0xf]
    %v1810 = vld [vmem:[%s3 + $0xe4] sm:$0xf]
    %v1811 = vld [vmem:[%s3 + $0xe8] sm:$0xf]
    %v1812 = vld [vmem:[%s3 + $0xec] sm:$0xf]
    %v1813 = vld [vmem:[%s3 + $0xf0] sm:$0xf]
    %v1814 = vld [vmem:[%s3 + $0xf4] sm:$0xf]
    %v1815 = vld [vmem:[%s3 + $0xf8] sm:$0xf]
    %v1816 = vld [vmem:[%s3 + $0xfc] sm:$0xf]
    %v1817 = vld [vmem:[%s4] sm:$0x1]
    %v1819 = vlaneseq
    %v1820 = vshrl.u32 %v1819, 7
    %v1821 = vsub.s32 0, %v1820
    %v1822 = vrot.slane %v1817, %v1821
    %v1888 = vunpack.c.l.b16 %v1753
    %v1889 = vunpack.c.l.b16 %v1754
    %v1890 = vunpack.c.l.b16 %v1755
    %v1891 = vunpack.c.l.b16 %v1756
    %v1892 = vunpack.c.l.b16 %v1757
    %v1893 = vunpack.c.l.b16 %v1758
    %v1894 = vunpack.c.l.b16 %v1759
    %v1895 = vunpack.c.l.b16 %v1760
    %v1896 = vunpack.c.l.b16 %v1761
    %v1897 = vunpack.c.l.b16 %v1762
    %v1898 = vunpack.c.l.b16 %v1763
    %v1899 = vunpack.c.l.b16 %v1764
    %v1900 = vunpack.c.l.b16 %v1765
    %v1901 = vunpack.c.l.b16 %v1766
    %v1902 = vunpack.c.l.b16 %v1767
    %v1903 = vunpack.c.l.b16 %v1768
    %v1904 = vunpack.c.l.b16 %v1769
    %v1905 = vunpack.c.l.b16 %v1770
    %v1906 = vunpack.c.l.b16 %v1771
    %v1907 = vunpack.c.l.b16 %v1772
    %v1908 = vunpack.c.l.b16 %v1773
    %v1909 = vunpack.c.l.b16 %v1774
    %v1910 = vunpack.c.l.b16 %v1775
    %v1911 = vunpack.c.l.b16 %v1776
    %v1912 = vunpack.c.l.b16 %v1777
    %v1913 = vunpack.c.l.b16 %v1778
    %v1914 = vunpack.c.l.b16 %v1779
    %v1915 = vunpack.c.l.b16 %v1780
    %v1916 = vunpack.c.l.b16 %v1781
    %v1917 = vunpack.c.l.b16 %v1782
    %v1918 = vunpack.c.l.b16 %v1783
    %v1919 = vunpack.c.l.b16 %v1784
    %v1920 = vunpack.c.l.b16 %v1785
    %v1921 = vunpack.c.l.b16 %v1786
    %v1922 = vunpack.c.l.b16 %v1787
    %v1923 = vunpack.c.l.b16 %v1788
    %v1924 = vunpack.c.l.b16 %v1789
    %v1925 = vunpack.c.l.b16 %v1790
    %v1926 = vunpack.c.l.b16 %v1791
    %v1927 = vunpack.c.l.b16 %v1792
    %v1928 = vunpack.c.l.b16 %v1793
    %v1929 = vunpack.c.l.b16 %v1794
    %v1930 = vunpack.c.l.b16 %v1795
    %v1931 = vunpack.c.l.b16 %v1796
    %v1932 = vunpack.c.l.b16 %v1797
    %v1933 = vunpack.c.l.b16 %v1798
    %v1934 = vunpack.c.l.b16 %v1799
    %v1935 = vunpack.c.l.b16 %v1800
    %v1936 = vunpack.c.l.b16 %v1801
    %v1937 = vunpack.c.l.b16 %v1802
    %v1938 = vunpack.c.l.b16 %v1803
    %v1939 = vunpack.c.l.b16 %v1804
    %v1940 = vunpack.c.l.b16 %v1805
    %v1941 = vunpack.c.l.b16 %v1806
    %v1942 = vunpack.c.l.b16 %v1807
    %v1943 = vunpack.c.l.b16 %v1808
    %v1944 = vunpack.c.l.b16 %v1809
    %v1945 = vunpack.c.l.b16 %v1810
    %v1946 = vunpack.c.l.b16 %v1811
    %v1947 = vunpack.c.l.b16 %v1812
    %v1948 = vunpack.c.l.b16 %v1813
    %v1949 = vunpack.c.l.b16 %v1814
    %v1950 = vunpack.c.l.b16 %v1815
    %v1951 = vunpack.c.l.b16 %v1816
    %v1952 = vpack.c.b16 %v1889, %v1888
    %v1953 = vpack.c.b16 %v1891, %v1890
    %v1954 = vpack.c.b16 %v1893, %v1892
    %v1955 = vpack.c.b16 %v1895, %v1894
    %v1956 = vpack.c.b16 %v1897, %v1896
    %v1957 = vpack.c.b16 %v1899, %v1898
    %v1958 = vpack.c.b16 %v1901, %v1900
    %v1959 = vpack.c.b16 %v1903, %v1902
    %v1960 = vpack.c.b16 %v1905, %v1904
    %v1961 = vpack.c.b16 %v1907, %v1906
    %v1962 = vpack.c.b16 %v1909, %v1908
    %v1963 = vpack.c.b16 %v1911, %v1910
    %v1964 = vpack.c.b16 %v1913, %v1912
    %v1965 = vpack.c.b16 %v1915, %v1914
    %v1966 = vpack.c.b16 %v1917, %v1916
    %v1967 = vpack.c.b16 %v1919, %v1918
    %v1968 = vpack.c.b16 %v1921, %v1920
    %v1969 = vpack.c.b16 %v1923, %v1922
    %v1970 = vpack.c.b16 %v1925, %v1924
    %v1971 = vpack.c.b16 %v1927, %v1926
    %v1972 = vpack.c.b16 %v1929, %v1928
    %v1973 = vpack.c.b16 %v1931, %v1930
    %v1974 = vpack.c.b16 %v1933, %v1932
    %v1975 = vpack.c.b16 %v1935, %v1934
    %v1976 = vpack.c.b16 %v1937, %v1936
    %v1977 = vpack.c.b16 %v1939, %v1938
    %v1978 = vpack.c.b16 %v1941, %v1940
    %v1979 = vpack.c.b16 %v1943, %v1942
    %v1980 = vpack.c.b16 %v1945, %v1944
    %v1981 = vpack.c.b16 %v1947, %v1946
    %v1982 = vpack.c.b16 %v1949, %v1948
    %v1983 = vpack.c.b16 %v1951, %v1950
    %2016 = vmatprep.subr.bf16.mxu0 0
    %2017 = vmatpush1.bf16.msra.mxu0 %v1952
    %2018 = vmatprep.subr.bf16.mxu0 0
    %2019 = vmatpush1.bf16.msra.mxu0 %v1953
    %2020 = vmatprep.subr.bf16.mxu0 0
    %2021 = vmatpush1.bf16.msra.mxu0 %v1954
    %2022 = vmatprep.subr.bf16.mxu0 0
    %2023 = vmatpush1.bf16.msra.mxu0 %v1955
    %2024 = vmatprep.subr.bf16.mxu0 0
    %2025 = vmatpush1.bf16.msra.mxu0 %v1956
    %2026 = vmatprep.subr.bf16.mxu0 0
    %2027 = vmatpush1.bf16.msra.mxu0 %v1957
    %2028 = vmatprep.subr.bf16.mxu0 0
    %2029 = vmatpush1.bf16.msra.mxu0 %v1958
    %2030 = vmatprep.subr.bf16.mxu0 0
    %2031 = vmatpush1.bf16.msra.mxu0 %v1959
    %2032 = vmatprep.subr.bf16.mxu0 0
    %2033 = vmatpush1.bf16.msra.mxu0 %v1960
    %2034 = vmatprep.subr.bf16.mxu0 0
    %2035 = vmatpush1.bf16.msra.mxu0 %v1961
    %2036 = vmatprep.subr.bf16.mxu0 0
    %2037 = vmatpush1.bf16.msra.mxu0 %v1962
    %2038 = vmatprep.subr.bf16.mxu0 0
    %2039 = vmatpush1.bf16.msra.mxu0 %v1963
    %2040 = vmatprep.subr.bf16.mxu0 0
    %2041 = vmatpush1.bf16.msra.mxu0 %v1964
    %2042 = vmatprep.subr.bf16.mxu0 0
    %2043 = vmatpush1.bf16.msra.mxu0 %v1965
    %2044 = vmatprep.subr.bf16.mxu0 0
    %2045 = vmatpush1.bf16.msra.mxu0 %v1966
    %2046 = vmatprep.subr.bf16.mxu0 0
    %2047 = vmatpush1.bf16.msra.mxu0 %v1967
    %2048 = vmatprep.mubr.bf16.mxu0 %v1750
    %2049 = vmatmul.mubr.bf16.gmra.mrb[0].mxu0 %v1749
    %v2050 = vpop.f32.mrb[0].mxu0
    %v2051 = vadd.f32 %v1822, %v2050
    %v2052 = vpop.f32.mrb[0].mxu0
    %v2053 = vpop.f32.mrb[0].mxu0
    %v2054 = vpop.f32.mrb[0].mxu0
    %2055 = vdwg.mxu0
    %2056 = vmatprep.subr.bf16.mxu0 0
    %2057 = vmatpush1.bf16.msra.mxu0 %v1968
    %2058 = vmatprep.subr.bf16.mxu0 0
    %2059 = vmatpush1.bf16.msra.mxu0 %v1969
    %2060 = vmatprep.subr.bf16.mxu0 0
    %2061 = vmatpush1.bf16.msra.mxu0 %v1970
    %2062 = vmatprep.subr.bf16.mxu0 0
    %2063 = vmatpush1.bf16.msra.mxu0 %v1971
    %2064 = vmatprep.subr.bf16.mxu0 0
    %2065 = vmatpush1.bf16.msra.mxu0 %v1972
    %2066 = vmatprep.subr.bf16.mxu0 0
    %2067 = vmatpush1.bf16.msra.mxu0 %v1973
    %2068 = vmatprep.subr.bf16.mxu0 0
    %2069 = vmatpush1.bf16.msra.mxu0 %v1974
    %2070 = vmatprep.subr.bf16.mxu0 0
    %2071 = vmatpush1.bf16.msra.mxu0 %v1975
    %2072 = vmatprep.subr.bf16.mxu0 0
    %2073 = vmatpush1.bf16.msra.mxu0 %v1976
    %2074 = vmatprep.subr.bf16.mxu0 0
    %2075 = vmatpush1.bf16.msra.mxu0 %v1977
    %2076 = vmatprep.subr.bf16.mxu0 0
    %2077 = vmatpush1.bf16.msra.mxu0 %v1978
    %2078 = vmatprep.subr.bf16.mxu0 0
    %2079 = vmatpush1.bf16.msra.mxu0 %v1979
    %2080 = vmatprep.subr.bf16.mxu0 0
    %2081 = vmatpush1.bf16.msra.mxu0 %v1980
    %2082 = vmatprep.subr.bf16.mxu0 0
    %2083 = vmatpush1.bf16.msra.mxu0 %v1981
    %2084 = vmatprep.subr.bf16.mxu0 0
    %2085 = vmatpush1.bf16.msra.mxu0 %v1982
    %2086 = vmatprep.subr.bf16.mxu0 0
    %2087 = vmatpush1.bf16.msra.mxu0 %v1983
    %2088 = vmatprep.mubr.bf16.mxu0 %v1752
    %2089 = vmatmul.mubr.bf16.gmra.mrb[0].mxu0 %v1751
    %v2090 = vpop.f32.mrb[0].mxu0
    %v2091 = vadd.f32 %v2051, %v2090
    %v2092 = vpop.f32.mrb[0].mxu0
    %v2093 = vpop.f32.mrb[0].mxu0
    %v2094 = vpop.f32.mrb[0].mxu0
    %2095 = vdwg.mxu0
    %2096 = vst [vmem:[#allocation2] sm:$0xff] %v2091
    // Predicated region
    $region22: #{neural_net_forward.1} parent=1 // pred_check
      _
    $region23: #{neural_net_forward.1} parent=1 // pred_check_branch
      %2098 = sbr.rel (0) target = $region25
    $region24: #{neural_net_forward.1} parent=1 // pred_region
      %s2100 = ssub.s32 128, 128
      %2101 = vsyncadd [#allocation3], %s2100
      %s2103 = sshll.u32 [#allocation2], 4
      %s2104 = int_to_ptr.vmem [resolvable:$true] %s2103
      %2106 = dma.vmem_to_hbm [thread:$0]  %s2104, 128, %s5, [#allocation3]
    $region25: #{neural_net_forward.1} parent=1 // pred_fallthru
      _
    // Predicated region
    $region26: #{neural_net_forward.1} parent=1 // pred_check
      _
    $region27: #{neural_net_forward.1} parent=1 // pred_check_branch
      %2108 = sbr.rel (0) target = $region29
    $region28: #{neural_net_forward.1} parent=1 // pred_region
      %2109 = dma.done [#allocation3], 128
    $region29: #{neural_net_forward.1} parent=1 // pred_fallthru
      _
    %2110 = vsyncpa [#allocation3], 1

</llo_original>
